<compile_context>
chip_gen: v6e
topology: v6e:2x2x1
jax: 0.10.0
libtpu: 0.0.40
codegen_flags: <defaults>
</compile_context>

<pallas_src>
import functools

import jax
import jax.numpy as jnp
from jax.experimental import pallas as pl
from jax.experimental.pallas import tpu as pltpu

BN_EPS = 1e-5
LN_EPS = 1e-5
_PW = 8                            # interior W offset in the dw pad scratch (sublane aligned)
_TILE_BUDGET = 2 << 20             # ~2 MiB per streaming input block
_VMEM_LIMIT = 48 * 1024 * 1024     # raise scoped VMEM (v5e default is only 16 MiB)


def _pick_tile(n, row_bytes, budget_bytes=_TILE_BUDGET):
    """Largest tile along an axis of length n (row_bytes bytes per tile-row) that divides n
    and keeps one block under budget_bytes.  Whole axis if it fits.
    NOTE: a large n with no power-of-two divisor degrades to small tiles; the demo shapes
    (and the usual power-of-two volumes) never hit that path."""
    if n * row_bytes <= budget_bytes:
        return n
    t = 1
    while (t * 2) <= n and n % (t * 2) == 0 and (t * 2) * row_bytes <= budget_bytes:
        t *= 2
    return t


# ----------------------------------------------------------------------------------
# 1) fused local_11conv + global_11conv (single (Cin, 2E) dot, lane-split outputs)
# ----------------------------------------------------------------------------------
def _proj_kernel(x_ref, w_ref, b_ref, ol_ref, og_ref, *, E):
    y = jnp.dot(x_ref[...], w_ref[...], preferred_element_type=jnp.float32) + b_ref[...]
    ol_ref[...] = y[:, :E]
    og_ref[...] = y[:, E:]


def input_projection(x2d, w_full, b_full, E):
    """x2d (N, Cin) -> (l0, g0), each (N, E).  One HBM pass over x, one fused MXU dot."""
    N, Cin = x2d.shape
    tile_n = _pick_tile(N, Cin * 4)
    # TODO(synk): cast matmul inputs to bf16 (f32 accumulate) on v6e/v7x once per-stage
    # tolerance checks are in place; kept f32 here to preserve the tight reference check.
    return pl.pallas_call(
        functools.partial(_proj_kernel, E=E),
        out_shape=(jax.ShapeDtypeStruct((N, E), jnp.float32),
                   jax.ShapeDtypeStruct((N, E), jnp.float32)),
        grid_spec=pltpu.PrefetchScalarGridSpec(
            num_scalar_prefetch=0,
            grid=(N // tile_n,),
            in_specs=[
                pl.BlockSpec((tile_n, Cin), lambda i: (i, 0)),
                pl.BlockSpec((Cin, 2 * E), lambda i: (0, 0)),
                pl.BlockSpec((1, 2 * E), lambda i: (0, 0)),
            ],
            out_specs=[pl.BlockSpec((tile_n, E), lambda i: (i, 0)),
                       pl.BlockSpec((tile_n, E), lambda i: (i, 0))],
        ),
        compiler_params=pltpu.CompilerParams(
            dimension_semantics=("parallel",), vmem_limit_bytes=_VMEM_LIMIT),
    )(x2d, w_full, b_full)


# ----------------------------------------------------------------------------------
# 2) fully fused ConvBranch (cb1..cb7 + spatial gate), activations stay in VMEM
# ----------------------------------------------------------------------------------
def _conv_branch_kernel(x_ref, pw_ref, dw_ref, sc_ref, sh_ref, o_ref, pad_ref, *, D, H, W):
    E = x_ref.shape[-1]
    S = D * H * W

    pw_all = pw_ref[...]          # (4, E, E)   cb1, cb3, cb5, cb7 pointwise weights
    dw_all = dw_ref[...]          # (3, 27, E)  cb2, cb4, cb6 depthwise taps (kd, kh, kw)
    sc = sc_ref[...]              # (6, E)      folded BN scales for cb1..cb6
    sh = sh_ref[...]              # (6, E)      folded BN shifts for cb1..cb6

    def pointwise(t2, w_idx, bn_row, act):
        y = jnp.dot(t2, pw_all[w_idx], preferred_element_type=jnp.float32)
        if bn_row is not None:
            y = y * sc[bn_row].reshape(1, E) + sh[bn_row].reshape(1, E)
        if act == "relu":
            y = jnp.maximum(y, 0.0)
        elif act == "silu":
            y = y * jax.nn.sigmoid(y)
        return y

    def dwconv(t4, w_idx, bn_row):
        # Zero-padded depthwise 3x3x3 via the persistent VMEM scratch.  The interior lives
        # at [1:1+D, 1:1+H, _PW:_PW+W, :] so the sublane store is tile aligned; the halo
        # stays zero (only the interior is overwritten between stages).
        pad_ref[1:1 + D, 1:1 + H, _PW:_PW + W, :] = t4
        w27 = dw_all[w_idx]
        xp = pad_ref[...]                                     # (D+2, H+2, _PW+W+1, E)
        acc = None                                            # seeded with tap 0
        for kw in range(3):                                   # hoist sublane-crossing slice
            xw = xp[:, :, _PW - 1 + kw:_PW - 1 + kw + W, :]   # (D+2, H+2, W, E)
            for kd in range(3):
                for kh in range(3):
                    k = kd * 9 + kh * 3 + kw
                    term = xw[kd:kd + D, kh:kh + H, :, :] * w27[k].reshape(1, 1, 1, E)
                    acc = term if acc is None else acc + term
        y = acc * sc[bn_row].reshape(1, 1, 1, E) + sh[bn_row].reshape(1, 1, 1, E)
        return jnp.maximum(y, 0.0)

    # Halo must be zero for every dw stage.  Zeroed every grid step on purpose: with
    # "parallel" batch semantics each TensorCore owns its own scratch (v7x has 2 TCs), so a
    # once-at-program_id-0 init would leave the second core's halo uninitialised.
    pad_ref[...] = jnp.zeros_like(pad_ref)

    l0 = x_ref[0]                            # (D, H, W, E)
    l0_2d = l0.reshape(S, E)

    t2 = pointwise(l0_2d, 0, 0, "relu")                     # cb1: 1x1x1 + BN + ReLU
    t4 = t2.reshape(D, H, W, E)
    t4 = t4 + dwconv(t4, 0, 1)                              # cb2: dw3x3x3 + BN + ReLU, residual
    t2 = pointwise(t4.reshape(S, E), 1, 2, "relu")          # cb3
    t4 = t2.reshape(D, H, W, E)
    t4 = t4 + dwconv(t4, 1, 3)                              # cb4
    t2 = pointwise(t4.reshape(S, E), 2, 4, "silu")          # cb5 (SiLU)
    t4 = t2.reshape(D, H, W, E)
    t4 = t4 + dwconv(t4, 2, 5)                              # cb6
    t2 = pointwise(t4.reshape(S, E), 3, None, "relu")       # cb7: 1x1x1 (no BN/bias) + ReLU
    gate = l0_2d + l0_2d * jax.nn.sigmoid(t2)               # spatial gate: res2 + res1*sigmoid
    o_ref[0] = gate.reshape(D, H, W, E)


def conv_branch(l0_5d, pw_stack, dw_stack, sc_stack, sh_stack):
    """Whole ConvBranch + gate, one kernel launch, 2 HBM passes over the activation."""
    B, D, H, W, E = l0_5d.shape
    # TODO(synk): for production D*H*W, tile the grid over (B, D-chunks) with a 3-voxel l0
    # halo (3 stacked dw3x3x3 stages) so the working set fits v7x's 64 MiB VMEM and both
    # TensorCores get work; whole-volume-per-batch is fine at demo sizes.
    # TODO(synk): lane-fold W into the minor dim ((D, H, W*E) + pltpu.roll(+-E) taps with
    # edge masks) to lift dw-stage lane occupancy from E/128 to min(W*E, 128)/128.
    return pl.pallas_call(
        functools.partial(_conv_branch_kernel, D=D, H=H, W=W),
        out_shape=jax.ShapeDtypeStruct((B, D, H, W, E), jnp.float32),
        grid_spec=pltpu.PrefetchScalarGridSpec(
            num_scalar_prefetch=0,
            grid=(B,),
            in_specs=[
                pl.BlockSpec((1, D, H, W, E), lambda b: (b, 0, 0, 0, 0)),
                pl.BlockSpec((4, E, E), lambda b: (0, 0, 0)),
                pl.BlockSpec((3, 27, E), lambda b: (0, 0, 0)),
                pl.BlockSpec((6, E), lambda b: (0, 0)),
                pl.BlockSpec((6, E), lambda b: (0, 0)),
            ],
            out_specs=pl.BlockSpec((1, D, H, W, E), lambda b: (b, 0, 0, 0, 0)),
            # left _PW columns for alignment, 1 column of right halo (saves VMEM on v7x)
            scratch_shapes=[pltpu.VMEM((D + 2, H + 2, _PW + W + 1, E), jnp.float32)],
        ),
        compiler_params=pltpu.CompilerParams(
            dimension_semantics=("parallel",), vmem_limit_bytes=_VMEM_LIMIT),
    )(l0_5d, pw_stack, dw_stack, sc_stack, sh_stack)


# ----------------------------------------------------------------------------------
# 3) ContextBlock: attention pool (tiled over S, online softmax) + channel_mul MLP
# ----------------------------------------------------------------------------------
def _context_kernel(x_ref, wm_ref, bm_ref, w1_ref, b1_ref, g_ref, be_ref, w2_ref, b2_ref,
                    o_ref, m_sc, l_sc, acc_sc):
    si = pl.program_id(1)

    @pl.when(si == 0)
    def _():
        m_sc[...] = jnp.full_like(m_sc, -jnp.inf)
        l_sc[...] = jnp.zeros_like(l_sc)
        acc_sc[...] = jnp.zeros_like(acc_sc)

    x = x_ref[0]                                                           # (tile_s, E)
    # mask logits: VPU multiply + lane (XLU) reduce instead of a degenerate N=1 MXU dot.
    logits = jnp.sum(x * wm_ref[...], axis=-1, keepdims=True) + bm_ref[...]
    m_old = m_sc[...]
    m_new = jnp.maximum(m_old, jnp.max(logits, axis=0, keepdims=True))     # (1, 1)
    alpha = jnp.exp(m_old - m_new)
    p = jnp.exp(logits - m_new)                                            # (tile_s, 1)
    l_sc[...] = alpha * l_sc[...] + jnp.sum(p, axis=0, keepdims=True)
    acc_sc[...] = alpha * acc_sc[...] + jnp.sum(x * p, axis=0, keepdims=True)
    m_sc[...] = m_new

    @pl.when(si == pl.num_programs(1) - 1)
    def _():
        ctx = acc_sc[...] / l_sc[...]                                      # (1, E)
        h = jnp.dot(ctx, w1_ref[...], preferred_element_type=jnp.float32) + b1_ref[...]
        mu = jnp.mean(h, axis=-1, keepdims=True)
        var = jnp.mean((h - mu) ** 2, axis=-1, keepdims=True)
        h = (h - mu) * jax.lax.rsqrt(var + LN_EPS)
        h = jnp.maximum(h * g_ref[...] + be_ref[...], 0.0)
        mul = jnp.dot(h, w2_ref[...], preferred_element_type=jnp.float32) + b2_ref[...]
        o_ref[...] = jax.nn.sigmoid(mul)                                   # (1, E)


def context_attention(g0_3d, mask_w, mask_b, cm1_w, cm1_b, ln_g, ln_b, cm2_w, cm2_b):
    """(B, S, E) -> sigmoid(channel_mul_conv(spatial_pool(x)))  of shape (B, E)."""
    B, S, E = g0_3d.shape
    P = cm1_w.shape[1]
    tile_s = _pick_tile(S, E * 4)

    def rep(shape):
        return pl.BlockSpec(shape, lambda b, s, n=len(shape): (0,) * n)

    return pl.pallas_call(
        _context_kernel,
        out_shape=jax.ShapeDtypeStruct((B, E), jnp.float32),
        grid_spec=pltpu.PrefetchScalarGridSpec(
            num_scalar_prefetch=0,
            grid=(B, S // tile_s),
            in_specs=[
                pl.BlockSpec((1, tile_s, E), lambda b, s: (b, s, 0)),
                rep((1, E)), rep((1, 1)),
                rep((E, P)), rep((1, P)), rep((1, P)), rep((1, P)),
                rep((P, E)), rep((1, E)),
            ],
            out_specs=pl.BlockSpec((1, E), lambda b, s: (b, 0)),
            scratch_shapes=[pltpu.VMEM((1, 1), jnp.float32),
                            pltpu.VMEM((1, 1), jnp.float32),
                            pltpu.VMEM((1, E), jnp.float32)],
        ),
        compiler_params=pltpu.CompilerParams(
            dimension_semantics=("parallel", "arbitrary"), vmem_limit_bytes=_VMEM_LIMIT),
    )(g0_3d, mask_w.reshape(1, E), mask_b.reshape(1, 1),
      cm1_w, cm1_b.reshape(1, P), ln_g.reshape(1, P), ln_b.reshape(1, P),
      cm2_w, cm2_b.reshape(1, E))


# ----------------------------------------------------------------------------------
# 4) channel-mul apply + concat + conv1_1 (+BN+ReLU) fused; lane-dense output store
# ----------------------------------------------------------------------------------
def _fuse_out_kernel(loc_ref, g_ref, sig_ref, w_ref, sc_ref, sh_ref, o_ref, *,
                     pack_rows, single_dot):
    E = loc_ref.shape[-1]
    loc = loc_ref[0]                                    # (tile_s, E)
    glob = g_ref[0] * (1.0 + sig_ref[...])              # out = g0 + g0*sigmoid(mul)
    w = w_ref[...]                                      # (2E, E) whole c11 weight
    if single_dot:
        cat = jnp.concatenate([loc, glob], axis=-1)     # in-register concat -> one K=2E dot
        y = jnp.dot(cat, w, preferred_element_type=jnp.float32)
    else:
        y = (jnp.dot(loc, w[:E], preferred_element_type=jnp.float32)
             + jnp.dot(glob, w[E:], preferred_element_type=jnp.float32))
    y = jnp.maximum(y * sc_ref[...] + sh_ref[...], 0.0)
    if pack_rows is None:
        o_ref[0] = y
    else:
        o_ref[0] = y.reshape(pack_rows, 128)            # lane-dense (128-wide) store


def fuse_output(local3, g0_3d, sig, w_cat, scale, shift):
    """channel-mul apply + concat + conv1_1(+BN+ReLU); returns (B, S, E)."""
    B, S, E = local3.shape
    tile_s = _pick_tile(S, 2 * E * 4)                   # two streaming inputs per tile

    def call(packed, single_dot):
        if packed:
            rows_total, rows_tile = (S * E) // 128, (tile_s * E) // 128
            out_shape = jax.ShapeDtypeStruct((B, rows_total, 128), jnp.float32)
            out_spec = pl.BlockSpec((1, rows_tile, 128), lambda b, s: (b, s, 0))
        else:
            rows_tile = None
            out_shape = jax.ShapeDtypeStruct((B, S, E), jnp.float32)
            out_spec = pl.BlockSpec((1, tile_s, E), lambda b, s: (b, s, 0))
        out = pl.pallas_call(
            functools.partial(_fuse_out_kernel, pack_rows=rows_tile, single_dot=single_dot),
            out_shape=out_shape,
            grid_spec=pltpu.PrefetchScalarGridSpec(
                num_scalar_prefetch=0,
                grid=(B, S // tile_s),
                in_specs=[
                    pl.BlockSpec((1, tile_s, E), lambda b, s: (b, s, 0)),
                    pl.BlockSpec((1, tile_s, E), lambda b, s: (b, s, 0)),
                    pl.BlockSpec((1, E), lambda b, s: (b, 0)),
                    pl.BlockSpec((2 * E, E), lambda b, s: (0, 0)),
                    pl.BlockSpec((1, E), lambda b, s: (0, 0)),
                    pl.BlockSpec((1, E), lambda b, s: (0, 0)),
                ],
                out_specs=out_spec,
            ),
            compiler_params=pltpu.CompilerParams(
                dimension_semantics=("parallel", "parallel"),
                vmem_limit_bytes=_VMEM_LIMIT),
        )(local3, g0_3d, sig, w_cat, scale.reshape(1, E), shift.reshape(1, E))
        return out.reshape(B, S, E)

    # lowering-robustness ladder: lane-dense + single dot -> unpacked + single dot ->
    # unpacked two-dot (previously validated).  Math is identical for all three.
    configs = []
    if (tile_s * E) % 128 == 0 and (S * E) % 128 == 0:
        configs.append((True, True))
    configs += [(False, True), (False, False)]
    for packed, single_dot in configs[:-1]:
        try:
            return call(packed, single_dot)
        except Exception:
            pass
    return call(*configs[-1])


# ----------------------------------------------------------------------------------
# Parameters & forward pass
# ----------------------------------------------------------------------------------
def bn_fold(bnp, eps=BN_EPS):
    scale = bnp["gamma"] / jnp.sqrt(bnp["var"] + eps)
    shift = bnp["beta"] - bnp["mean"] * scale
    return scale, shift


def init_params(key, input_dim, embed_dim):
    E = embed_dim
    half = input_dim // 2
    P = 2 * E  # ContextBlock planes = inplanes * ratio, ratio = 2
    keys = iter(jax.random.split(key, 64))

    def rand(shape, scale=0.1):
        return (scale * jax.random.normal(next(keys), shape)).astype(jnp.float32)

    def bn(c):
        return dict(gamma=1.0 + rand((c,)), beta=rand((c,)),
                    mean=rand((c,)), var=0.5 + jnp.abs(rand((c,), 1.0)))

    p = {}
    p["local11_w"] = rand((half, E)); p["local11_b"] = rand((E,))
    p["global11_w"] = rand((half, E)); p["global11_b"] = rand((E,))
    for i, kind in enumerate(["pw", "dw", "pw", "dw", "pw", "dw"], start=1):
        if kind == "pw":
            p[f"cb{i}_w"] = rand((E, E))
        else:
            p[f"cb{i}_dw"] = rand((27, E))
        p[f"cb{i}_bn"] = bn(E)
    p["cb7_w"] = rand((E, E))
    p["mask_w"] = rand((E,)); p["mask_b"] = rand(())
    p["cm1_w"] = rand((E, P)); p["cm1_b"] = rand((P,))
    p["ln_g"] = 1.0 + rand((P,)); p["ln_b"] = rand((P,))
    p["cm2_w"] = rand((P, E)); p["cm2_b"] = rand((E,))
    p["c11_w"] = rand((2 * E, E)); p["c11_bn"] = bn(E)
    return p


def glsa_forward(x_ncdhw, params, embed_dim):
    """Pallas implementation of GLSA.forward.  Input/output are NCDHW like PyTorch."""
    p = params
    B, Cin, D, H, W = x_ncdhw.shape
    E = embed_dim
    half = Cin // 2
    S = D * H * W
    N = B * S

    x = jnp.transpose(x_ncdhw, (0, 2, 3, 4, 1)).astype(jnp.float32).reshape(N, Cin)

    # ---- fused local_11conv + global_11conv: one (Cin, 2E) block-diagonal weight ----
    w_full = (jnp.zeros((Cin, 2 * E), jnp.float32)
              .at[:half, :E].set(p["local11_w"])
              .at[half:, E:].set(p["global11_w"]))
    b_full = jnp.concatenate([p["local11_b"], p["global11_b"]]).reshape(1, 2 * E)
    l0, g0 = input_projection(x, w_full, b_full, E)

    # ---- local branch: ConvBranch fully fused in VMEM ----
    pw_stack = jnp.stack([p["cb1_w"], p["cb3_w"], p["cb5_w"], p["cb7_w"]])
    dw_stack = jnp.stack([p["cb2_dw"], p["cb4_dw"], p["cb6_dw"]])
    scs, shs = zip(*(bn_fold(p[f"cb{i}_bn"]) for i in range(1, 7)))
    local5 = conv_branch(l0.reshape(B, D, H, W, E), pw_stack, dw_stack,
                         jnp.stack(scs), jnp.stack(shs))

    # ---- global branch: ContextBlock attention pool + channel_mul MLP ----
    g0_3d = g0.reshape(B, S, E)
    sig = context_attention(g0_3d, p["mask_w"], p["mask_b"], p["cm1_w"], p["cm1_b"],
                            p["ln_g"], p["ln_b"], p["cm2_w"], p["cm2_b"])       # (B, E)

    # ---- channel-mul apply + concat + conv1_1 (+BN+ReLU), all fused ----
    c11_scale, c11_shift = bn_fold(p["c11_bn"])
    out3 = fuse_output(local5.reshape(B, S, E), g0_3d, sig,
                       p["c11_w"], c11_scale, c11_shift)
    return jnp.transpose(out3.reshape(B, D, H, W, E), (0, 4, 1, 2, 3))


# ----------------------------------------------------------------------------------
# Pure-JAX reference (same math, independent lowering) for a sanity check
# ----------------------------------------------------------------------------------
def glsa_reference(x_ncdhw, params, embed_dim):
    p = params
    E = embed_dim
    B, Cin, D, H, W = x_ncdhw.shape
    half = Cin // 2
    hp = jax.lax.Precision.HIGHEST
    x = jnp.transpose(x_ncdhw, (0, 2, 3, 4, 1)).astype(jnp.float32)
    x0, x1 = x[..., :half], x[..., half:]

    def pw(t, w, scale, shift, act):
        y = jnp.einsum("...i,io->...o", t, w, precision=hp) * scale + shift
        if act == "relu":
            y = jax.nn.relu(y)
        elif act == "silu":
            y = y * jax.nn.sigmoid(y)
        return y

    def dw(t, w27, scale, shift):
        rhs = w27.reshape(3, 3, 3, t.shape[-1])[:, :, :, None, :]
        y = jax.lax.conv_general_dilated(
            t, rhs, window_strides=(1, 1, 1), padding="SAME",
            dimension_numbers=("NDHWC", "DHWIO", "NDHWC"),
            feature_group_count=t.shape[-1], precision=hp)
        return jax.nn.relu(y * scale + shift)

    l0 = pw(x0, p["local11_w"], 1.0, p["local11_b"], "none")
    t = pw(l0, p["cb1_w"], *bn_fold(p["cb1_bn"]), act="relu")
    t = t + dw(t, p["cb2_dw"], *bn_fold(p["cb2_bn"]))
    t = pw(t, p["cb3_w"], *bn_fold(p["cb3_bn"]), act="relu")
    t = t + dw(t, p["cb4_dw"], *bn_fold(p["cb4_bn"]))
    t = pw(t, p["cb5_w"], *bn_fold(p["cb5_bn"]), act="silu")
    t = t + dw(t, p["cb6_dw"], *bn_fold(p["cb6_bn"]))
    t = pw(t, p["cb7_w"], 1.0, 0.0, act="relu")
    local = l0 + l0 * jax.nn.sigmoid(t)

    g0 = pw(x1, p["global11_w"], 1.0, p["global11_b"], "none")
    S = D * H * W
    g0f = g0.reshape(B, S, E)
    logits = jnp.einsum("bsc,c->bs", g0f, p["mask_w"], precision=hp) + p["mask_b"]
    pm = jax.nn.softmax(logits, axis=1)[..., None]
    ctx = jnp.sum(g0f * pm, axis=1)
    h = jnp.einsum("bc,cp->bp", ctx, p["cm1_w"], precision=hp) + p["cm1_b"]
    mu = h.mean(axis=-1, keepdims=True)
    var = ((h - mu) ** 2).mean(axis=-1, keepdims=True)
    h = (h - mu) / jnp.sqrt(var + LN_EPS) * p["ln_g"] + p["ln_b"]
    h = jax.nn.relu(h)
    mul = jnp.einsum("bp,pc->bc", h, p["cm2_w"], precision=hp) + p["cm2_b"]
    glob = g0 + g0 * jax.nn.sigmoid(mul)[:, None, None, None, :]

    cat = jnp.concatenate([local, glob], axis=-1)
    out = pw(cat, p["c11_w"], *bn_fold(p["c11_bn"]), act="relu")
    return jnp.transpose(out, (0, 4, 1, 2, 3))


# ----------------------------------------------------------------------------------
if __name__ == "__main__":
    # Small shapes consistent with the module: GLSA(input_dim=64, embed_dim=32)
    B, input_dim, D, H, W = 2, 64, 8, 8, 8
    embed_dim = 32

    key = jax.random.PRNGKey(0)
    kx, kp = jax.random.split(key)
    x = jax.random.normal(kx, (B, input_dim, D, H, W), dtype=jnp.float32)  # NCDHW
    params = init_params(kp, input_dim, embed_dim)

    ref = jax.block_until_ready(glsa_reference(x, params, embed_dim))
    out = jax.block_until_ready(glsa_forward(x, params, embed_dim))

    max_err = float(jnp.max(jnp.abs(out - ref)))
    assert max_err < 5e-2, f"pallas path mismatch vs reference: {max_err}"
    assert out.shape == (B, embed_dim, D, H, W), out.shape
    assert bool(jnp.all(jnp.isfinite(out)))
    print("KERNEL_OK")
</pallas_src>

<mosaic_0001>
module attributes {stable_mosaic.version = 11 : i64} {
  func.func @_proj_kernel(%arg0: i32, %arg1: memref<1024x64xf32, #tpu.memory_space<vmem>>, %arg2: memref<64x64xf32, #tpu.memory_space<vmem>>, %arg3: memref<1x64xf32, #tpu.memory_space<vmem>>, %arg4: memref<1024x32xf32, #tpu.memory_space<vmem>>, %arg5: memref<1024x32xf32, #tpu.memory_space<vmem>>) attributes {dimension_semantics = [#tpu.dimension_semantics<parallel>], iteration_bounds = array<i64: 1>, scalar_prefetch = 0 : i64, scratch_operands = 0 : i64, tpu.core_type = #tpu.core_type<tc>, window_params = [{transform_indices = @transform_0, window_bounds = array<i64: 1024, 64>}, {pipeline_mode = #tpu.pipeline_mode<synchronous>, transform_indices = @transform_1, window_bounds = array<i64: 64, 64>}, {pipeline_mode = #tpu.pipeline_mode<synchronous>, transform_indices = @transform_2, window_bounds = array<i64: 1, 64>}, {transform_indices = @transform_3, window_bounds = array<i64: 1024, 32>}, {transform_indices = @transform_4, window_bounds = array<i64: 1024, 32>}]} {
    %c0 = arith.constant 0 : index
    %c0_0 = arith.constant 0 : index
    %0 = vector.load %arg1[%c0, %c0_0] : memref<1024x64xf32, #tpu.memory_space<vmem>>, vector<1024x64xf32>
    %c0_1 = arith.constant 0 : index
    %c0_2 = arith.constant 0 : index
    %1 = vector.load %arg2[%c0_1, %c0_2] : memref<64x64xf32, #tpu.memory_space<vmem>>, vector<64x64xf32>
    %cst = arith.constant dense<0.000000e+00> : vector<1024x64xf32>
    %2 = tpu.matmul %0, %1, %cst {dimension_numbers = #tpu.dot_dimension_numbers<[1], [0], [0], [1], [0, 0, 1, 1], [], []>} : vector<1024x64xf32>, vector<64x64xf32>, vector<1024x64xf32> -> vector<1024x64xf32>
    %c0_3 = arith.constant 0 : index
    %c0_4 = arith.constant 0 : index
    %3 = vector.load %arg3[%c0_3, %c0_4] : memref<1x64xf32, #tpu.memory_space<vmem>>, vector<1x64xf32>
    %4 = vector.broadcast %3 : vector<1x64xf32> to vector<1024x64xf32>
    %5 = arith.addf %2, %4 : vector<1024x64xf32>
    %6 = vector.extract_strided_slice %5 {offsets = [0, 0], sizes = [1024, 32], strides = [1, 1]} : vector<1024x64xf32> to vector<1024x32xf32>
    %c0_5 = arith.constant 0 : index
    %c0_6 = arith.constant 0 : index
    %7 = vector.load %arg4[%c0_5, %c0_6] : memref<1024x32xf32, #tpu.memory_space<vmem>>, vector<1024x32xf32>
    tpu.vector_store %arg4[%c0_5, %c0_6], %6 {strides = array<i32>} : memref<1024x32xf32, #tpu.memory_space<vmem>>, vector<1024x32xf32>,
    %8 = vector.extract_strided_slice %5 {offsets = [0, 32], sizes = [1024, 32], strides = [1, 1]} : vector<1024x64xf32> to vector<1024x32xf32>
    %c0_7 = arith.constant 0 : index
    %c0_8 = arith.constant 0 : index
    %9 = vector.load %arg5[%c0_7, %c0_8] : memref<1024x32xf32, #tpu.memory_space<vmem>>, vector<1024x32xf32>
    tpu.vector_store %arg5[%c0_7, %c0_8], %8 {strides = array<i32>} : memref<1024x32xf32, #tpu.memory_space<vmem>>, vector<1024x32xf32>,
    return
  }
  func.func @transform_0(%arg0: i32) -> (i32, i32) {
    %c0_i32 = arith.constant 0 : i32
    %c0_i32_0 = arith.constant 0 : i32
    return %arg0, %c0_i32 : i32, i32
  }
  func.func @transform_1(%arg0: i32) -> (i32, i32) {
    %c0_i32 = arith.constant 0 : i32
    %c0_i32_0 = arith.constant 0 : i32
    %c0_i32_1 = arith.constant 0 : i32
    return %c0_i32, %c0_i32_0 : i32, i32
  }
  func.func @transform_2(%arg0: i32) -> (i32, i32) {
    %c0_i32 = arith.constant 0 : i32
    %c0_i32_0 = arith.constant 0 : i32
    %c0_i32_1 = arith.constant 0 : i32
    return %c0_i32, %c0_i32_0 : i32, i32
  }
  func.func @transform_3(%arg0: i32) -> (i32, i32) {
    %c0_i32 = arith.constant 0 : i32
    %c0_i32_0 = arith.constant 0 : i32
    return %arg0, %c0_i32 : i32, i32
  }
  func.func @transform_4(%arg0: i32) -> (i32, i32) {
    %c0_i32 = arith.constant 0 : i32
    %c0_i32_0 = arith.constant 0 : i32
    return %arg0, %c0_i32 : i32, i32
  }
}

</mosaic_0001>

<llo_original>
// kernel: tpu_custom_call.1
$region0: #{tpu_custom_call.1}
  #allocation0 [shape = 'u32[]', space=smem, size = 0x4, offset = 0x4, fixed_abs, tag = 'smem constant byte address 0x4 - core index']
  #allocation1 [shape = 'u32[144,128]{1,0:T(1,128)}', space=vmem, size = 0x12000, scoped, tag = 'internal scratch']
  %s0 = inlined_call_operand.vmem [shape: f32[1024,64], index: 0, kind: input, shape index: {}]
  %s1 = inlined_call_operand.vmem [shape: f32[64,64], index: 1, kind: input, shape index: {}]
  %s2 = inlined_call_operand.vmem [shape: f32[1,64], index: 2, kind: input, shape index: {}]
  %s3 = inlined_call_operand.vmem [shape: f32[1024,32], index: 3, kind: output, shape index: {0}]
  %s4 = inlined_call_operand.vmem [shape: f32[1024,32], index: 4, kind: output, shape index: {1}]
  %5 = xla_tuple %s3, %s4
  %s6 = sld [smem:[#allocation0]]
  $region30: #{tpu_custom_call.1} parent=0
    _
  %s8 = ssub.s32 1, %s6
  %s9 = scalar_select 0, %s8, %s6
  // Predicated region
  $region2: #{tpu_custom_call.1} parent=0 // pred_check
    _
  $region3: #{tpu_custom_call.1} parent=0 // pred_check_branch
    %11 = sbr.rel (0) target = $region5
  $region4: #{tpu_custom_call.1} parent=0 // pred_region
    _
  $region5: #{tpu_custom_call.1} parent=0 // pred_fallthru
    _
  // Predicated region
  $region6: #{tpu_custom_call.1} parent=0 // pred_check
    _
  $region7: #{tpu_custom_call.1} parent=0 // pred_check_branch
    %13 = sbr.rel (0) target = $region9
  $region8: #{tpu_custom_call.1} parent=0 // pred_region
    _
  $region9: #{tpu_custom_call.1} parent=0 // pred_fallthru
    _
  // Predicated region
  $region10: #{tpu_custom_call.1} parent=0 // pred_check
    _
  $region11: #{tpu_custom_call.1} parent=0 // pred_check_branch
    %15 = sbr.rel (0) target = $region13
  $region12: #{tpu_custom_call.1} parent=0 // pred_region
    _
  $region13: #{tpu_custom_call.1} parent=0 // pred_fallthru
    _
  %v16 = vld [vmem:[%s0] sm:$0xff]
  %v17 = vld [vmem:[%s0 + $0x8] sm:$0xff]
  %v18 = vld [vmem:[%s0 + $0x10] sm:$0xff]
  %v19 = vld [vmem:[%s0 + $0x18] sm:$0xff]
  %v20 = vld [vmem:[%s0 + $0x20] sm:$0xff]
  %v21 = vld [vmem:[%s0 + $0x28] sm:$0xff]
  %v22 = vld [vmem:[%s0 + $0x30] sm:$0xff]
  %v23 = vld [vmem:[%s0 + $0x38] sm:$0xff]
  %v24 = vld [vmem:[%s0 + $0x40] sm:$0xff]
  %v25 = vld [vmem:[%s0 + $0x48] sm:$0xff]
  %v26 = vld [vmem:[%s0 + $0x50] sm:$0xff]
  %v27 = vld [vmem:[%s0 + $0x58] sm:$0xff]
  %v28 = vld [vmem:[%s0 + $0x60] sm:$0xff]
  %v29 = vld [vmem:[%s0 + $0x68] sm:$0xff]
  %v30 = vld [vmem:[%s0 + $0x70] sm:$0xff]
  %v31 = vld [vmem:[%s0 + $0x78] sm:$0xff]
  %v32 = vld [vmem:[%s0 + $0x80] sm:$0xff]
  %v33 = vld [vmem:[%s0 + $0x88] sm:$0xff]
  %v34 = vld [vmem:[%s0 + $0x90] sm:$0xff]
  %v35 = vld [vmem:[%s0 + $0x98] sm:$0xff]
  %v36 = vld [vmem:[%s0 + $0xa0] sm:$0xff]
  %v37 = vld [vmem:[%s0 + $0xa8] sm:$0xff]
  %v38 = vld [vmem:[%s0 + $0xb0] sm:$0xff]
  %v39 = vld [vmem:[%s0 + $0xb8] sm:$0xff]
  %v40 = vld [vmem:[%s0 + $0xc0] sm:$0xff]
  %v41 = vld [vmem:[%s0 + $0xc8] sm:$0xff]
  %v42 = vld [vmem:[%s0 + $0xd0] sm:$0xff]
  %v43 = vld [vmem:[%s0 + $0xd8] sm:$0xff]
  %v44 = vld [vmem:[%s0 + $0xe0] sm:$0xff]
  %v45 = vld [vmem:[%s0 + $0xe8] sm:$0xff]
  %v46 = vld [vmem:[%s0 + $0xf0] sm:$0xff]
  %v47 = vld [vmem:[%s0 + $0xf8] sm:$0xff]
  %v48 = vld [vmem:[%s0 + $0x100] sm:$0xff]
  %v49 = vld [vmem:[%s0 + $0x108] sm:$0xff]
  %v50 = vld [vmem:[%s0 + $0x110] sm:$0xff]
  %v51 = vld [vmem:[%s0 + $0x118] sm:$0xff]
  %v52 = vld [vmem:[%s0 + $0x120] sm:$0xff]
  %v53 = vld [vmem:[%s0 + $0x128] sm:$0xff]
  %v54 = vld [vmem:[%s0 + $0x130] sm:$0xff]
  %v55 = vld [vmem:[%s0 + $0x138] sm:$0xff]
  %v56 = vld [vmem:[%s0 + $0x140] sm:$0xff]
  %v57 = vld [vmem:[%s0 + $0x148] sm:$0xff]
  %v58 = vld [vmem:[%s0 + $0x150] sm:$0xff]
  %v59 = vld [vmem:[%s0 + $0x158] sm:$0xff]
  %v60 = vld [vmem:[%s0 + $0x160] sm:$0xff]
  %v61 = vld [vmem:[%s0 + $0x168] sm:$0xff]
  %v62 = vld [vmem:[%s0 + $0x170] sm:$0xff]
  %v63 = vld [vmem:[%s0 + $0x178] sm:$0xff]
  %v64 = vld [vmem:[%s0 + $0x180] sm:$0xff]
  %v65 = vld [vmem:[%s0 + $0x188] sm:$0xff]
  %v66 = vld [vmem:[%s0 + $0x190] sm:$0xff]
  %v67 = vld [vmem:[%s0 + $0x198] sm:$0xff]
  %v68 = vld [vmem:[%s0 + $0x1a0] sm:$0xff]
  %v69 = vld [vmem:[%s0 + $0x1a8] sm:$0xff]
  %v70 = vld [vmem:[%s0 + $0x1b0] sm:$0xff]
  %v71 = vld [vmem:[%s0 + $0x1b8] sm:$0xff]
  %v72 = vld [vmem:[%s0 + $0x1c0] sm:$0xff]
  %v73 = vld [vmem:[%s0 + $0x1c8] sm:$0xff]
  %v74 = vld [vmem:[%s0 + $0x1d0] sm:$0xff]
  %v75 = vld [vmem:[%s0 + $0x1d8] sm:$0xff]
  %v76 = vld [vmem:[%s0 + $0x1e0] sm:$0xff]
  %v77 = vld [vmem:[%s0 + $0x1e8] sm:$0xff]
  %v78 = vld [vmem:[%s0 + $0x1f0] sm:$0xff]
  %v79 = vld [vmem:[%s0 + $0x1f8] sm:$0xff]
  %v80 = vld [vmem:[%s0 + $0x200] sm:$0xff]
  %v81 = vld [vmem:[%s0 + $0x208] sm:$0xff]
  %v82 = vld [vmem:[%s0 + $0x210] sm:$0xff]
  %v83 = vld [vmem:[%s0 + $0x218] sm:$0xff]
  %v84 = vld [vmem:[%s0 + $0x220] sm:$0xff]
  %v85 = vld [vmem:[%s0 + $0x228] sm:$0xff]
  %v86 = vld [vmem:[%s0 + $0x230] sm:$0xff]
  %v87 = vld [vmem:[%s0 + $0x238] sm:$0xff]
  %v88 = vld [vmem:[%s0 + $0x240] sm:$0xff]
  %v89 = vld [vmem:[%s0 + $0x248] sm:$0xff]
  %v90 = vld [vmem:[%s0 + $0x250] sm:$0xff]
  %v91 = vld [vmem:[%s0 + $0x258] sm:$0xff]
  %v92 = vld [vmem:[%s0 + $0x260] sm:$0xff]
  %v93 = vld [vmem:[%s0 + $0x268] sm:$0xff]
  %v94 = vld [vmem:[%s0 + $0x270] sm:$0xff]
  %v95 = vld [vmem:[%s0 + $0x278] sm:$0xff]
  %v96 = vld [vmem:[%s0 + $0x280] sm:$0xff]
  %v97 = vld [vmem:[%s0 + $0x288] sm:$0xff]
  %v98 = vld [vmem:[%s0 + $0x290] sm:$0xff]
  %v99 = vld [vmem:[%s0 + $0x298] sm:$0xff]
  %v100 = vld [vmem:[%s0 + $0x2a0] sm:$0xff]
  %v101 = vld [vmem:[%s0 + $0x2a8] sm:$0xff]
  %v102 = vld [vmem:[%s0 + $0x2b0] sm:$0xff]
  %v103 = vld [vmem:[%s0 + $0x2b8] sm:$0xff]
  %v104 = vld [vmem:[%s0 + $0x2c0] sm:$0xff]
  %v105 = vld [vmem:[%s0 + $0x2c8] sm:$0xff]
  %v106 = vld [vmem:[%s0 + $0x2d0] sm:$0xff]
  %v107 = vld [vmem:[%s0 + $0x2d8] sm:$0xff]
  %v108 = vld [vmem:[%s0 + $0x2e0] sm:$0xff]
  %v109 = vld [vmem:[%s0 + $0x2e8] sm:$0xff]
  %v110 = vld [vmem:[%s0 + $0x2f0] sm:$0xff]
  %v111 = vld [vmem:[%s0 + $0x2f8] sm:$0xff]
  %v112 = vld [vmem:[%s0 + $0x300] sm:$0xff]
  %v113 = vld [vmem:[%s0 + $0x308] sm:$0xff]
  %v114 = vld [vmem:[%s0 + $0x310] sm:$0xff]
  %v115 = vld [vmem:[%s0 + $0x318] sm:$0xff]
  %v116 = vld [vmem:[%s0 + $0x320] sm:$0xff]
  %v117 = vld [vmem:[%s0 + $0x328] sm:$0xff]
  %v118 = vld [vmem:[%s0 + $0x330] sm:$0xff]
  %v119 = vld [vmem:[%s0 + $0x338] sm:$0xff]
  %v120 = vld [vmem:[%s0 + $0x340] sm:$0xff]
  %v121 = vld [vmem:[%s0 + $0x348] sm:$0xff]
  %v122 = vld [vmem:[%s0 + $0x350] sm:$0xff]
  %v123 = vld [vmem:[%s0 + $0x358] sm:$0xff]
  %v124 = vld [vmem:[%s0 + $0x360] sm:$0xff]
  %v125 = vld [vmem:[%s0 + $0x368] sm:$0xff]
  %v126 = vld [vmem:[%s0 + $0x370] sm:$0xff]
  %v127 = vld [vmem:[%s0 + $0x378] sm:$0xff]
  %v128 = vld [vmem:[%s0 + $0x380] sm:$0xff]
  %v129 = vld [vmem:[%s0 + $0x388] sm:$0xff]
  %v130 = vld [vmem:[%s0 + $0x390] sm:$0xff]
  %v131 = vld [vmem:[%s0 + $0x398] sm:$0xff]
  %v132 = vld [vmem:[%s0 + $0x3a0] sm:$0xff]
  %v133 = vld [vmem:[%s0 + $0x3a8] sm:$0xff]
  %v134 = vld [vmem:[%s0 + $0x3b0] sm:$0xff]
  %v135 = vld [vmem:[%s0 + $0x3b8] sm:$0xff]
  %v136 = vld [vmem:[%s0 + $0x3c0] sm:$0xff]
  %v137 = vld [vmem:[%s0 + $0x3c8] sm:$0xff]
  %v138 = vld [vmem:[%s0 + $0x3d0] sm:$0xff]
  %v139 = vld [vmem:[%s0 + $0x3d8] sm:$0xff]
  %v140 = vld [vmem:[%s0 + $0x3e0] sm:$0xff]
  %v141 = vld [vmem:[%s0 + $0x3e8] sm:$0xff]
  %v142 = vld [vmem:[%s0 + $0x3f0] sm:$0xff]
  %v143 = vld [vmem:[%s0 + $0x3f8] sm:$0xff]
  %v144 = vld [vmem:[%s1] sm:$0xff]
  %v145 = vld [vmem:[%s1 + $0x8] sm:$0xff]
  %v146 = vld [vmem:[%s1 + $0x10] sm:$0xff]
  %v147 = vld [vmem:[%s1 + $0x18] sm:$0xff]
  %v148 = vld [vmem:[%s1 + $0x20] sm:$0xff]
  %v149 = vld [vmem:[%s1 + $0x28] sm:$0xff]
  %v150 = vld [vmem:[%s1 + $0x30] sm:$0xff]
  %v151 = vld [vmem:[%s1 + $0x38] sm:$0xff]
  %v152 = vld [vmem:[%s2] sm:$0x1]
  %v154 = vlaneseq
  %v155 = vshrl.u32 %v154, 7
  %v156 = vsub.s32 0, %v155
  %v157 = vrot.slane %v152, %v156
  %vm159 = vcmask 523264
  %v161 = vsel %vm159, %v16, 0
  %v164 = vsel %vm159, %v17, 0
  %v167 = vsel %vm159, %v18, 0
  %v170 = vsel %vm159, %v19, 0
  %v173 = vsel %vm159, %v20, 0
  %v176 = vsel %vm159, %v21, 0
  %v179 = vsel %vm159, %v22, 0
  %v182 = vsel %vm159, %v23, 0
  %v185 = vsel %vm159, %v24, 0
  %v188 = vsel %vm159, %v25, 0
  %v191 = vsel %vm159, %v26, 0
  %v194 = vsel %vm159, %v27, 0
  %v197 = vsel %vm159, %v28, 0
  %v200 = vsel %vm159, %v29, 0
  %v203 = vsel %vm159, %v30, 0
  %v206 = vsel %vm159, %v31, 0
  %v209 = vsel %vm159, %v32, 0
  %v212 = vsel %vm159, %v33, 0
  %v215 = vsel %vm159, %v34, 0
  %v218 = vsel %vm159, %v35, 0
  %v221 = vsel %vm159, %v36, 0
  %v224 = vsel %vm159, %v37, 0
  %v227 = vsel %vm159, %v38, 0
  %v230 = vsel %vm159, %v39, 0
  %v233 = vsel %vm159, %v40, 0
  %v236 = vsel %vm159, %v41, 0
  %v239 = vsel %vm159, %v42, 0
  %v242 = vsel %vm159, %v43, 0
  %v245 = vsel %vm159, %v44, 0
  %v248 = vsel %vm159, %v45, 0
  %v251 = vsel %vm159, %v46, 0
  %v254 = vsel %vm159, %v47, 0
  %v257 = vsel %vm159, %v48, 0
  %v260 = vsel %vm159, %v49, 0
  %v263 = vsel %vm159, %v50, 0
  %v266 = vsel %vm159, %v51, 0
  %v269 = vsel %vm159, %v52, 0
  %v272 = vsel %vm159, %v53, 0
  %v275 = vsel %vm159, %v54, 0
  %v278 = vsel %vm159, %v55, 0
  %v281 = vsel %vm159, %v56, 0
  %v284 = vsel %vm159, %v57, 0
  %v287 = vsel %vm159, %v58, 0
  %v290 = vsel %vm159, %v59, 0
  %v293 = vsel %vm159, %v60, 0
  %v296 = vsel %vm159, %v61, 0
  %v299 = vsel %vm159, %v62, 0
  %v302 = vsel %vm159, %v63, 0
  %v305 = vsel %vm159, %v64, 0
  %v308 = vsel %vm159, %v65, 0
  %v311 = vsel %vm159, %v66, 0
  %v314 = vsel %vm159, %v67, 0
  %v317 = vsel %vm159, %v68, 0
  %v320 = vsel %vm159, %v69, 0
  %v323 = vsel %vm159, %v70, 0
  %v326 = vsel %vm159, %v71, 0
  %v329 = vsel %vm159, %v72, 0
  %v332 = vsel %vm159, %v73, 0
  %v335 = vsel %vm159, %v74, 0
  %v338 = vsel %vm159, %v75, 0
  %v341 = vsel %vm159, %v76, 0
  %v344 = vsel %vm159, %v77, 0
  %v347 = vsel %vm159, %v78, 0
  %v350 = vsel %vm159, %v79, 0
  %v353 = vsel %vm159, %v80, 0
  %v356 = vsel %vm159, %v81, 0
  %v359 = vsel %vm159, %v82, 0
  %v362 = vsel %vm159, %v83, 0
  %v365 = vsel %vm159, %v84, 0
  %v368 = vsel %vm159, %v85, 0
  %v371 = vsel %vm159, %v86, 0
  %v374 = vsel %vm159, %v87, 0
  %v377 = vsel %vm159, %v88, 0
  %v380 = vsel %vm159, %v89, 0
  %v383 = vsel %vm159, %v90, 0
  %v386 = vsel %vm159, %v91, 0
  %v389 = vsel %vm159, %v92, 0
  %v392 = vsel %vm159, %v93, 0
  %v395 = vsel %vm159, %v94, 0
  %v398 = vsel %vm159, %v95, 0
  %v401 = vsel %vm159, %v96, 0
  %v404 = vsel %vm159, %v97, 0
  %v407 = vsel %vm159, %v98, 0
  %v410 = vsel %vm159, %v99, 0
  %v413 = vsel %vm159, %v100, 0
  %v416 = vsel %vm159, %v101, 0
  %v419 = vsel %vm159, %v102, 0
  %v422 = vsel %vm159, %v103, 0
  %v425 = vsel %vm159, %v104, 0
  %v428 = vsel %vm159, %v105, 0
  %v431 = vsel %vm159, %v106, 0
  %v434 = vsel %vm159, %v107, 0
  %v437 = vsel %vm159, %v108, 0
  %v440 = vsel %vm159, %v109, 0
  %v443 = vsel %vm159, %v110, 0
  %v446 = vsel %vm159, %v111, 0
  %v449 = vsel %vm159, %v112, 0
  %v452 = vsel %vm159, %v113, 0
  %v455 = vsel %vm159, %v114, 0
  %v458 = vsel %vm159, %v115, 0
  %v461 = vsel %vm159, %v116, 0
  %v464 = vsel %vm159, %v117, 0
  %v467 = vsel %vm159, %v118, 0
  %v470 = vsel %vm159, %v119, 0
  %v473 = vsel %vm159, %v120, 0
  %v476 = vsel %vm159, %v121, 0
  %v479 = vsel %vm159, %v122, 0
  %v482 = vsel %vm159, %v123, 0
  %v485 = vsel %vm159, %v124, 0
  %v488 = vsel %vm159, %v125, 0
  %v491 = vsel %vm159, %v126, 0
  %v494 = vsel %vm159, %v127, 0
  %v497 = vsel %vm159, %v128, 0
  %v500 = vsel %vm159, %v129, 0
  %v503 = vsel %vm159, %v130, 0
  %v506 = vsel %vm159, %v131, 0
  %v509 = vsel %vm159, %v132, 0
  %v512 = vsel %vm159, %v133, 0
  %v515 = vsel %vm159, %v134, 0
  %v518 = vsel %vm159, %v135, 0
  %v521 = vsel %vm159, %v136, 0
  %v524 = vsel %vm159, %v137, 0
  %v527 = vsel %vm159, %v138, 0
  %v530 = vsel %vm159, %v139, 0
  %v533 = vsel %vm159, %v140, 0
  %v536 = vsel %vm159, %v141, 0
  %v539 = vsel %vm159, %v142, 0
  %v542 = vsel %vm159, %v143, 0
  %544 = vmatprep.subr.mxu0 0.0
  %545 = vmatpush1.msra.mxu0 0.0
  %546 = vmatprep.subr.mxu0 0.0
  %547 = vmatpush1.msra.mxu0 0.0
  %548 = vmatprep.subr.mxu0 0.0
  %549 = vmatpush1.msra.mxu0 0.0
  %550 = vmatprep.subr.mxu0 0.0
  %551 = vmatpush1.msra.mxu0 0.0
  %552 = vmatprep.subr.mxu0 0.0
  %553 = vmatpush1.msra.mxu0 0.0
  %554 = vmatprep.subr.mxu0 0.0
  %555 = vmatpush1.msra.mxu0 0.0
  %556 = vmatprep.subr.mxu0 0.0
  %557 = vmatpush1.msra.mxu0 0.0
  %558 = vmatprep.subr.mxu0 0.0
  %559 = vmatpush1.msra.mxu0 0.0
  %560 = vmatprep.subr.mxu0 0.0
  %561 = vmatpush1.msra.mxu0 %v151
  %562 = vmatprep.subr.mxu0 0.0
  %563 = vmatpush1.msra.mxu0 %v150
  %564 = vmatprep.subr.mxu0 0.0
  %565 = vmatpush1.msra.mxu0 %v149
  %566 = vmatprep.subr.mxu0 0.0
  %567 = vmatpush1.msra.mxu0 %v148
  %568 = vmatprep.subr.mxu0 0.0
  %569 = vmatpush1.msra.mxu0 %v147
  %570 = vmatprep.subr.mxu0 0.0
  %571 = vmatpush1.msra.mxu0 %v146
  %572 = vmatprep.subr.mxu0 0.0
  %573 = vmatpush1.msra.mxu0 %v145
  %574 = vmatprep.subr.mxu0 0.0
  %575 = vmatpush1.msra.mxu0 %v144
  %576 = vmatprep.subr.mxu0 0.0
  %577 = vmatpush2.msra.mxu0 0.0
  %578 = vmatprep.subr.mxu0 0.0
  %579 = vmatpush2.msra.mxu0 0.0
  %580 = vmatprep.subr.mxu0 0.0
  %581 = vmatpush2.msra.mxu0 0.0
  %582 = vmatprep.subr.mxu0 0.0
  %583 = vmatpush2.msra.mxu0 0.0
  %584 = vmatprep.subr.mxu0 0.0
  %585 = vmatpush2.msra.mxu0 0.0
  %586 = vmatprep.subr.mxu0 0.0
  %587 = vmatpush2.msra.mxu0 0.0
  %588 = vmatprep.subr.mxu0 0.0
  %589 = vmatpush2.msra.mxu0 0.0
  %590 = vmatprep.subr.mxu0 0.0
  %591 = vmatpush2.msra.mxu0 0.0
  %592 = vmatprep.subr.mxu0 0.0
  %593 = vmatpush2.msra.mxu0 0.0
  %594 = vmatprep.subr.mxu0 0.0
  %595 = vmatpush2.msra.mxu0 0.0
  %596 = vmatprep.subr.mxu0 0.0
  %597 = vmatpush2.msra.mxu0 0.0
  %598 = vmatprep.subr.mxu0 0.0
  %599 = vmatpush2.msra.mxu0 0.0
  %600 = vmatprep.subr.mxu0 0.0
  %601 = vmatpush2.msra.mxu0 0.0
  %602 = vmatprep.subr.mxu0 0.0
  %603 = vmatpush2.msra.mxu0 0.0
  %604 = vmatprep.subr.mxu0 0.0
  %605 = vmatpush2.msra.mxu0 0.0
  %606 = vmatprep.subr.mxu0 0.0
  %607 = vmatpush2.msra.mxu0 0.0
  %608 = vmatprep.mubr.f32.mxu0 0.0
  %609 = vmatmul.mubr.f32.gmra.mxu0 %v161
  %v610 = vpop.f32.mrf.mxu0
  %v611 = vadd.f32 %v157, %v610
  %v612 = vpop.f32.mrf.mxu0
  %613 = vmatprep.mubr.f32.mxu0 0.0
  %614 = vmatmul.mubr.f32.gmra.mxu0 %v164
  %v615 = vpop.f32.mrf.mxu0
  %v616 = vadd.f32 %v157, %v615
  %v617 = vpop.f32.mrf.mxu0
  %618 = vmatprep.mubr.f32.mxu0 0.0
  %619 = vmatmul.mubr.f32.gmra.mxu0 %v167
  %v620 = vpop.f32.mrf.mxu0
  %v621 = vadd.f32 %v157, %v620
  %v622 = vpop.f32.mrf.mxu0
  %623 = vmatprep.mubr.f32.mxu0 0.0
  %624 = vmatmul.mubr.f32.gmra.mxu0 %v170
  %v625 = vpop.f32.mrf.mxu0
  %v626 = vadd.f32 %v157, %v625
  %v627 = vpop.f32.mrf.mxu0
  %628 = vmatprep.mubr.f32.mxu0 0.0
  %629 = vmatmul.mubr.f32.gmra.mxu0 %v173
  %v630 = vpop.f32.mrf.mxu0
  %v631 = vadd.f32 %v157, %v630
  %v632 = vpop.f32.mrf.mxu0
  %633 = vmatprep.mubr.f32.mxu0 0.0
  %634 = vmatmul.mubr.f32.gmra.mxu0 %v176
  %v635 = vpop.f32.mrf.mxu0
  %v636 = vadd.f32 %v157, %v635
  %v637 = vpop.f32.mrf.mxu0
  %638 = vmatprep.mubr.f32.mxu0 0.0
  %639 = vmatmul.mubr.f32.gmra.mxu0 %v179
  %v640 = vpop.f32.mrf.mxu0
  %v641 = vadd.f32 %v157, %v640
  %v642 = vpop.f32.mrf.mxu0
  %643 = vmatprep.mubr.f32.mxu0 0.0
  %644 = vmatmul.mubr.f32.gmra.mxu0 %v182
  %v645 = vpop.f32.mrf.mxu0
  %v646 = vadd.f32 %v157, %v645
  %v647 = vpop.f32.mrf.mxu0
  %648 = vmatprep.mubr.f32.mxu0 0.0
  %649 = vmatmul.mubr.f32.gmra.mxu0 %v185
  %v650 = vpop.f32.mrf.mxu0
  %v651 = vadd.f32 %v157, %v650
  %v652 = vpop.f32.mrf.mxu0
  %653 = vmatprep.mubr.f32.mxu0 0.0
  %654 = vmatmul.mubr.f32.gmra.mxu0 %v188
  %v655 = vpop.f32.mrf.mxu0
  %v656 = vadd.f32 %v157, %v655
  %v657 = vpop.f32.mrf.mxu0
  %658 = vmatprep.mubr.f32.mxu0 0.0
  %659 = vmatmul.mubr.f32.gmra.mxu0 %v191
  %v660 = vpop.f32.mrf.mxu0
  %v661 = vadd.f32 %v157, %v660
  %v662 = vpop.f32.mrf.mxu0
  %663 = vmatprep.mubr.f32.mxu0 0.0
  %664 = vmatmul.mubr.f32.gmra.mxu0 %v194
  %v665 = vpop.f32.mrf.mxu0
  %v666 = vadd.f32 %v157, %v665
  %v667 = vpop.f32.mrf.mxu0
  %668 = vmatprep.mubr.f32.mxu0 0.0
  %669 = vmatmul.mubr.f32.gmra.mxu0 %v197
  %v670 = vpop.f32.mrf.mxu0
  %v671 = vadd.f32 %v157, %v670
  %v672 = vpop.f32.mrf.mxu0
  %673 = vmatprep.mubr.f32.mxu0 0.0
  %674 = vmatmul.mubr.f32.gmra.mxu0 %v200
  %v675 = vpop.f32.mrf.mxu0
  %v676 = vadd.f32 %v157, %v675
  %v677 = vpop.f32.mrf.mxu0
  %678 = vmatprep.mubr.f32.mxu0 0.0
  %679 = vmatmul.mubr.f32.gmra.mxu0 %v203
  %v680 = vpop.f32.mrf.mxu0
  %v681 = vadd.f32 %v157, %v680
  %v682 = vpop.f32.mrf.mxu0
  %683 = vmatprep.mubr.f32.mxu0 0.0
  %684 = vmatmul.mubr.f32.gmra.mxu0 %v206
  %v685 = vpop.f32.mrf.mxu0
  %v686 = vadd.f32 %v157, %v685
  %v687 = vpop.f32.mrf.mxu0
  %688 = vmatprep.mubr.f32.mxu0 0.0
  %689 = vmatmul.mubr.f32.gmra.mxu0 %v209
  %v690 = vpop.f32.mrf.mxu0
  %v691 = vadd.f32 %v157, %v690
  %v692 = vpop.f32.mrf.mxu0
  %693 = vmatprep.mubr.f32.mxu0 0.0
  %694 = vmatmul.mubr.f32.gmra.mxu0 %v212
  %v695 = vpop.f32.mrf.mxu0
  %v696 = vadd.f32 %v157, %v695
  %v697 = vpop.f32.mrf.mxu0
  %698 = vmatprep.mubr.f32.mxu0 0.0
  %699 = vmatmul.mubr.f32.gmra.mxu0 %v215
  %v700 = vpop.f32.mrf.mxu0
  %v701 = vadd.f32 %v157, %v700
  %v702 = vpop.f32.mrf.mxu0
  %703 = vmatprep.mubr.f32.mxu0 0.0
  %704 = vmatmul.mubr.f32.gmra.mxu0 %v218
  %v705 = vpop.f32.mrf.mxu0
  %v706 = vadd.f32 %v157, %v705
  %v707 = vpop.f32.mrf.mxu0
  %708 = vmatprep.mubr.f32.mxu0 0.0
  %709 = vmatmul.mubr.f32.gmra.mxu0 %v221
  %v710 = vpop.f32.mrf.mxu0
  %v711 = vadd.f32 %v157, %v710
  %v712 = vpop.f32.mrf.mxu0
  %713 = vmatprep.mubr.f32.mxu0 0.0
  %714 = vmatmul.mubr.f32.gmra.mxu0 %v224
  %v715 = vpop.f32.mrf.mxu0
  %v716 = vadd.f32 %v157, %v715
  %v717 = vpop.f32.mrf.mxu0
  %718 = vmatprep.mubr.f32.mxu0 0.0
  %719 = vmatmul.mubr.f32.gmra.mxu0 %v227
  %v720 = vpop.f32.mrf.mxu0
  %v721 = vadd.f32 %v157, %v720
  %v722 = vpop.f32.mrf.mxu0
  %723 = vmatprep.mubr.f32.mxu0 0.0
  %724 = vmatmul.mubr.f32.gmra.mxu0 %v230
  %v725 = vpop.f32.mrf.mxu0
  %v726 = vadd.f32 %v157, %v725
  %v727 = vpop.f32.mrf.mxu0
  %728 = vmatprep.mubr.f32.mxu0 0.0
  %729 = vmatmul.mubr.f32.gmra.mxu0 %v233
  %v730 = vpop.f32.mrf.mxu0
  %v731 = vadd.f32 %v157, %v730
  %v732 = vpop.f32.mrf.mxu0
  %733 = vmatprep.mubr.f32.mxu0 0.0
  %734 = vmatmul.mubr.f32.gmra.mxu0 %v236
  %v735 = vpop.f32.mrf.mxu0
  %v736 = vadd.f32 %v157, %v735
  %v737 = vpop.f32.mrf.mxu0
  %738 = vmatprep.mubr.f32.mxu0 0.0
  %739 = vmatmul.mubr.f32.gmra.mxu0 %v239
  %v740 = vpop.f32.mrf.mxu0
  %v741 = vadd.f32 %v157, %v740
  %v742 = vpop.f32.mrf.mxu0
  %743 = vmatprep.mubr.f32.mxu0 0.0
  %744 = vmatmul.mubr.f32.gmra.mxu0 %v242
  %v745 = vpop.f32.mrf.mxu0
  %v746 = vadd.f32 %v157, %v745
  %v747 = vpop.f32.mrf.mxu0
  %748 = vmatprep.mubr.f32.mxu0 0.0
  %749 = vmatmul.mubr.f32.gmra.mxu0 %v245
  %v750 = vpop.f32.mrf.mxu0
  %v751 = vadd.f32 %v157, %v750
  %v752 = vpop.f32.mrf.mxu0
  %753 = vmatprep.mubr.f32.mxu0 0.0
  %754 = vmatmul.mubr.f32.gmra.mxu0 %v248
  %v755 = vpop.f32.mrf.mxu0
  %v756 = vadd.f32 %v157, %v755
  %v757 = vpop.f32.mrf.mxu0
  %758 = vmatprep.mubr.f32.mxu0 0.0
  %759 = vmatmul.mubr.f32.gmra.mxu0 %v251
  %v760 = vpop.f32.mrf.mxu0
  %v761 = vadd.f32 %v157, %v760
  %v762 = vpop.f32.mrf.mxu0
  %763 = vmatprep.mubr.f32.mxu0 0.0
  %764 = vmatmul.mubr.f32.gmra.mxu0 %v254
  %v765 = vpop.f32.mrf.mxu0
  %v766 = vadd.f32 %v157, %v765
  %v767 = vpop.f32.mrf.mxu0
  %768 = vmatprep.mubr.f32.mxu0 0.0
  %769 = vmatmul.mubr.f32.gmra.mxu0 %v257
  %v770 = vpop.f32.mrf.mxu0
  %v771 = vadd.f32 %v157, %v770
  %v772 = vpop.f32.mrf.mxu0
  %773 = vmatprep.mubr.f32.mxu0 0.0
  %774 = vmatmul.mubr.f32.gmra.mxu0 %v260
  %v775 = vpop.f32.mrf.mxu0
  %v776 = vadd.f32 %v157, %v775
  %v777 = vpop.f32.mrf.mxu0
  %778 = vmatprep.mubr.f32.mxu0 0.0
  %779 = vmatmul.mubr.f32.gmra.mxu0 %v263
  %v780 = vpop.f32.mrf.mxu0
  %v781 = vadd.f32 %v157, %v780
  %v782 = vpop.f32.mrf.mxu0
  %783 = vmatprep.mubr.f32.mxu0 0.0
  %784 = vmatmul.mubr.f32.gmra.mxu0 %v266
  %v785 = vpop.f32.mrf.mxu0
  %v786 = vadd.f32 %v157, %v785
  %v787 = vpop.f32.mrf.mxu0
  %788 = vmatprep.mubr.f32.mxu0 0.0
  %789 = vmatmul.mubr.f32.gmra.mxu0 %v269
  %v790 = vpop.f32.mrf.mxu0
  %v791 = vadd.f32 %v157, %v790
  %v792 = vpop.f32.mrf.mxu0
  %793 = vmatprep.mubr.f32.mxu0 0.0
  %794 = vmatmul.mubr.f32.gmra.mxu0 %v272
  %v795 = vpop.f32.mrf.mxu0
  %v796 = vadd.f32 %v157, %v795
  %v797 = vpop.f32.mrf.mxu0
  %798 = vmatprep.mubr.f32.mxu0 0.0
  %799 = vmatmul.mubr.f32.gmra.mxu0 %v275
  %v800 = vpop.f32.mrf.mxu0
  %v801 = vadd.f32 %v157, %v800
  %v802 = vpop.f32.mrf.mxu0
  %803 = vmatprep.mubr.f32.mxu0 0.0
  %804 = vmatmul.mubr.f32.gmra.mxu0 %v278
  %v805 = vpop.f32.mrf.mxu0
  %v806 = vadd.f32 %v157, %v805
  %v807 = vpop.f32.mrf.mxu0
  %808 = vmatprep.mubr.f32.mxu0 0.0
  %809 = vmatmul.mubr.f32.gmra.mxu0 %v281
  %v810 = vpop.f32.mrf.mxu0
  %v811 = vadd.f32 %v157, %v810
  %v812 = vpop.f32.mrf.mxu0
  %813 = vmatprep.mubr.f32.mxu0 0.0
  %814 = vmatmul.mubr.f32.gmra.mxu0 %v284
  %v815 = vpop.f32.mrf.mxu0
  %v816 = vadd.f32 %v157, %v815
  %v817 = vpop.f32.mrf.mxu0
  %818 = vmatprep.mubr.f32.mxu0 0.0
  %819 = vmatmul.mubr.f32.gmra.mxu0 %v287
  %v820 = vpop.f32.mrf.mxu0
  %v821 = vadd.f32 %v157, %v820
  %v822 = vpop.f32.mrf.mxu0
  %823 = vmatprep.mubr.f32.mxu0 0.0
  %824 = vmatmul.mubr.f32.gmra.mxu0 %v290
  %v825 = vpop.f32.mrf.mxu0
  %v826 = vadd.f32 %v157, %v825
  %v827 = vpop.f32.mrf.mxu0
  %828 = vmatprep.mubr.f32.mxu0 0.0
  %829 = vmatmul.mubr.f32.gmra.mxu0 %v293
  %v830 = vpop.f32.mrf.mxu0
  %v831 = vadd.f32 %v157, %v830
  %v832 = vpop.f32.mrf.mxu0
  %833 = vmatprep.mubr.f32.mxu0 0.0
  %834 = vmatmul.mubr.f32.gmra.mxu0 %v296
  %v835 = vpop.f32.mrf.mxu0
  %v836 = vadd.f32 %v157, %v835
  %v837 = vpop.f32.mrf.mxu0
  %838 = vmatprep.mubr.f32.mxu0 0.0
  %839 = vmatmul.mubr.f32.gmra.mxu0 %v299
  %v840 = vpop.f32.mrf.mxu0
  %v841 = vadd.f32 %v157, %v840
  %v842 = vpop.f32.mrf.mxu0
  %843 = vmatprep.mubr.f32.mxu0 0.0
  %844 = vmatmul.mubr.f32.gmra.mxu0 %v302
  %v845 = vpop.f32.mrf.mxu0
  %v846 = vadd.f32 %v157, %v845
  %v847 = vpop.f32.mrf.mxu0
  %848 = vmatprep.mubr.f32.mxu0 0.0
  %849 = vmatmul.mubr.f32.gmra.mxu0 %v305
  %v850 = vpop.f32.mrf.mxu0
  %v851 = vadd.f32 %v157, %v850
  %v852 = vpop.f32.mrf.mxu0
  %853 = vmatprep.mubr.f32.mxu0 0.0
  %854 = vmatmul.mubr.f32.gmra.mxu0 %v308
  %v855 = vpop.f32.mrf.mxu0
  %v856 = vadd.f32 %v157, %v855
  %v857 = vpop.f32.mrf.mxu0
  %858 = vmatprep.mubr.f32.mxu0 0.0
  %859 = vmatmul.mubr.f32.gmra.mxu0 %v311
  %v860 = vpop.f32.mrf.mxu0
  %v861 = vadd.f32 %v157, %v860
  %v862 = vpop.f32.mrf.mxu0
  %863 = vmatprep.mubr.f32.mxu0 0.0
  %864 = vmatmul.mubr.f32.gmra.mxu0 %v314
  %v865 = vpop.f32.mrf.mxu0
  %v866 = vadd.f32 %v157, %v865
  %v867 = vpop.f32.mrf.mxu0
  %868 = vmatprep.mubr.f32.mxu0 0.0
  %869 = vmatmul.mubr.f32.gmra.mxu0 %v317
  %v870 = vpop.f32.mrf.mxu0
  %v871 = vadd.f32 %v157, %v870
  %v872 = vpop.f32.mrf.mxu0
  %873 = vmatprep.mubr.f32.mxu0 0.0
  %874 = vmatmul.mubr.f32.gmra.mxu0 %v320
  %v875 = vpop.f32.mrf.mxu0
  %v876 = vadd.f32 %v157, %v875
  %v877 = vpop.f32.mrf.mxu0
  %878 = vmatprep.mubr.f32.mxu0 0.0
  %879 = vmatmul.mubr.f32.gmra.mxu0 %v323
  %v880 = vpop.f32.mrf.mxu0
  %v881 = vadd.f32 %v157, %v880
  %v882 = vpop.f32.mrf.mxu0
  %883 = vmatprep.mubr.f32.mxu0 0.0
  %884 = vmatmul.mubr.f32.gmra.mxu0 %v326
  %v885 = vpop.f32.mrf.mxu0
  %v886 = vadd.f32 %v157, %v885
  %v887 = vpop.f32.mrf.mxu0
  %888 = vmatprep.mubr.f32.mxu0 0.0
  %889 = vmatmul.mubr.f32.gmra.mxu0 %v329
  %v890 = vpop.f32.mrf.mxu0
  %v891 = vadd.f32 %v157, %v890
  %v892 = vpop.f32.mrf.mxu0
  %893 = vmatprep.mubr.f32.mxu0 0.0
  %894 = vmatmul.mubr.f32.gmra.mxu0 %v332
  %v895 = vpop.f32.mrf.mxu0
  %v896 = vadd.f32 %v157, %v895
  %v897 = vpop.f32.mrf.mxu0
  %898 = vmatprep.mubr.f32.mxu0 0.0
  %899 = vmatmul.mubr.f32.gmra.mxu0 %v335
  %v900 = vpop.f32.mrf.mxu0
  %v901 = vadd.f32 %v157, %v900
  %v902 = vpop.f32.mrf.mxu0
  %903 = vmatprep.mubr.f32.mxu0 0.0
  %904 = vmatmul.mubr.f32.gmra.mxu0 %v338
  %v905 = vpop.f32.mrf.mxu0
  %v906 = vadd.f32 %v157, %v905
  %v907 = vpop.f32.mrf.mxu0
  %908 = vmatprep.mubr.f32.mxu0 0.0
  %909 = vmatmul.mubr.f32.gmra.mxu0 %v341
  %v910 = vpop.f32.mrf.mxu0
  %v911 = vadd.f32 %v157, %v910
  %v912 = vpop.f32.mrf.mxu0
  %913 = vmatprep.mubr.f32.mxu0 0.0
  %914 = vmatmul.mubr.f32.gmra.mxu0 %v344
  %v915 = vpop.f32.mrf.mxu0
  %v916 = vadd.f32 %v157, %v915
  %v917 = vpop.f32.mrf.mxu0
  %918 = vmatprep.mubr.f32.mxu0 0.0
  %919 = vmatmul.mubr.f32.gmra.mxu0 %v347
  %v920 = vpop.f32.mrf.mxu0
  %v921 = vadd.f32 %v157, %v920
  %v922 = vpop.f32.mrf.mxu0
  %923 = vmatprep.mubr.f32.mxu0 0.0
  %924 = vmatmul.mubr.f32.gmra.mxu0 %v350
  %v925 = vpop.f32.mrf.mxu0
  %v926 = vadd.f32 %v157, %v925
  %v927 = vpop.f32.mrf.mxu0
  %928 = vmatprep.mubr.f32.mxu0 0.0
  %929 = vmatmul.mubr.f32.gmra.mxu0 %v353
  %v930 = vpop.f32.mrf.mxu0
  %v931 = vadd.f32 %v157, %v930
  %v932 = vpop.f32.mrf.mxu0
  %933 = vmatprep.mubr.f32.mxu0 0.0
  %934 = vmatmul.mubr.f32.gmra.mxu0 %v356
  %v935 = vpop.f32.mrf.mxu0
  %v936 = vadd.f32 %v157, %v935
  %v937 = vpop.f32.mrf.mxu0
  %938 = vmatprep.mubr.f32.mxu0 0.0
  %939 = vmatmul.mubr.f32.gmra.mxu0 %v359
  %v940 = vpop.f32.mrf.mxu0
  %v941 = vadd.f32 %v157, %v940
  %v942 = vpop.f32.mrf.mxu0
  %943 = vmatprep.mubr.f32.mxu0 0.0
  %944 = vmatmul.mubr.f32.gmra.mxu0 %v362
  %v945 = vpop.f32.mrf.mxu0
  %v946 = vadd.f32 %v157, %v945
  %v947 = vpop.f32.mrf.mxu0
  %948 = vmatprep.mubr.f32.mxu0 0.0
  %949 = vmatmul.mubr.f32.gmra.mxu0 %v365
  %v950 = vpop.f32.mrf.mxu0
  %v951 = vadd.f32 %v157, %v950
  %v952 = vpop.f32.mrf.mxu0
  %953 = vmatprep.mubr.f32.mxu0 0.0
  %954 = vmatmul.mubr.f32.gmra.mxu0 %v368
  %v955 = vpop.f32.mrf.mxu0
  %v956 = vadd.f32 %v157, %v955
  %v957 = vpop.f32.mrf.mxu0
  %958 = vmatprep.mubr.f32.mxu0 0.0
  %959 = vmatmul.mubr.f32.gmra.mxu0 %v371
  %v960 = vpop.f32.mrf.mxu0
  %v961 = vadd.f32 %v157, %v960
  %v962 = vpop.f32.mrf.mxu0
  %963 = vmatprep.mubr.f32.mxu0 0.0
  %964 = vmatmul.mubr.f32.gmra.mxu0 %v374
  %v965 = vpop.f32.mrf.mxu0
  %v966 = vadd.f32 %v157, %v965
  %v967 = vpop.f32.mrf.mxu0
  %968 = vmatprep.mubr.f32.mxu0 0.0
  %969 = vmatmul.mubr.f32.gmra.mxu0 %v377
  %v970 = vpop.f32.mrf.mxu0
  %v971 = vadd.f32 %v157, %v970
  %v972 = vpop.f32.mrf.mxu0
  %973 = vmatprep.mubr.f32.mxu0 0.0
  %974 = vmatmul.mubr.f32.gmra.mxu0 %v380
  %v975 = vpop.f32.mrf.mxu0
  %v976 = vadd.f32 %v157, %v975
  %v977 = vpop.f32.mrf.mxu0
  %978 = vmatprep.mubr.f32.mxu0 0.0
  %979 = vmatmul.mubr.f32.gmra.mxu0 %v383
  %v980 = vpop.f32.mrf.mxu0
  %v981 = vadd.f32 %v157, %v980
  %v982 = vpop.f32.mrf.mxu0
  %983 = vmatprep.mubr.f32.mxu0 0.0
  %984 = vmatmul.mubr.f32.gmra.mxu0 %v386
  %v985 = vpop.f32.mrf.mxu0
  %v986 = vadd.f32 %v157, %v985
  %v987 = vpop.f32.mrf.mxu0
  %988 = vmatprep.mubr.f32.mxu0 0.0
  %989 = vmatmul.mubr.f32.gmra.mxu0 %v389
  %v990 = vpop.f32.mrf.mxu0
  %v991 = vadd.f32 %v157, %v990
  %v992 = vpop.f32.mrf.mxu0
  %993 = vmatprep.mubr.f32.mxu0 0.0
  %994 = vmatmul.mubr.f32.gmra.mxu0 %v392
  %v995 = vpop.f32.mrf.mxu0
  %v996 = vadd.f32 %v157, %v995
  %v997 = vpop.f32.mrf.mxu0
  %998 = vmatprep.mubr.f32.mxu0 0.0
  %999 = vmatmul.mubr.f32.gmra.mxu0 %v395
  %v1000 = vpop.f32.mrf.mxu0
  %v1001 = vadd.f32 %v157, %v1000
  %v1002 = vpop.f32.mrf.mxu0
  %1003 = vmatprep.mubr.f32.mxu0 0.0
  %1004 = vmatmul.mubr.f32.gmra.mxu0 %v398
  %v1005 = vpop.f32.mrf.mxu0
  %v1006 = vadd.f32 %v157, %v1005
  %v1007 = vpop.f32.mrf.mxu0
  %1008 = vmatprep.mubr.f32.mxu0 0.0
  %1009 = vmatmul.mubr.f32.gmra.mxu0 %v401
  %v1010 = vpop.f32.mrf.mxu0
  %v1011 = vadd.f32 %v157, %v1010
  %v1012 = vpop.f32.mrf.mxu0
  %1013 = vmatprep.mubr.f32.mxu0 0.0
  %1014 = vmatmul.mubr.f32.gmra.mxu0 %v404
  %v1015 = vpop.f32.mrf.mxu0
  %v1016 = vadd.f32 %v157, %v1015
  %v1017 = vpop.f32.mrf.mxu0
  %1018 = vmatprep.mubr.f32.mxu0 0.0
  %1019 = vmatmul.mubr.f32.gmra.mxu0 %v407
  %v1020 = vpop.f32.mrf.mxu0
  %v1021 = vadd.f32 %v157, %v1020
  %v1022 = vpop.f32.mrf.mxu0
  %1023 = vmatprep.mubr.f32.mxu0 0.0
  %1024 = vmatmul.mubr.f32.gmra.mxu0 %v410
  %v1025 = vpop.f32.mrf.mxu0
  %v1026 = vadd.f32 %v157, %v1025
  %v1027 = vpop.f32.mrf.mxu0
  %1028 = vmatprep.mubr.f32.mxu0 0.0
  %1029 = vmatmul.mubr.f32.gmra.mxu0 %v413
  %v1030 = vpop.f32.mrf.mxu0
  %v1031 = vadd.f32 %v157, %v1030
  %v1032 = vpop.f32.mrf.mxu0
  %1033 = vmatprep.mubr.f32.mxu0 0.0
  %1034 = vmatmul.mubr.f32.gmra.mxu0 %v416
  %v1035 = vpop.f32.mrf.mxu0
  %v1036 = vadd.f32 %v157, %v1035
  %v1037 = vpop.f32.mrf.mxu0
  %1038 = vmatprep.mubr.f32.mxu0 0.0
  %1039 = vmatmul.mubr.f32.gmra.mxu0 %v419
  %v1040 = vpop.f32.mrf.mxu0
  %v1041 = vadd.f32 %v157, %v1040
  %v1042 = vpop.f32.mrf.mxu0
  %1043 = vmatprep.mubr.f32.mxu0 0.0
  %1044 = vmatmul.mubr.f32.gmra.mxu0 %v422
  %v1045 = vpop.f32.mrf.mxu0
  %v1046 = vadd.f32 %v157, %v1045
  %v1047 = vpop.f32.mrf.mxu0
  %1048 = vmatprep.mubr.f32.mxu0 0.0
  %1049 = vmatmul.mubr.f32.gmra.mxu0 %v425
  %v1050 = vpop.f32.mrf.mxu0
  %v1051 = vadd.f32 %v157, %v1050
  %v1052 = vpop.f32.mrf.mxu0
  %1053 = vmatprep.mubr.f32.mxu0 0.0
  %1054 = vmatmul.mubr.f32.gmra.mxu0 %v428
  %v1055 = vpop.f32.mrf.mxu0
  %v1056 = vadd.f32 %v157, %v1055
  %v1057 = vpop.f32.mrf.mxu0
  %1058 = vmatprep.mubr.f32.mxu0 0.0
  %1059 = vmatmul.mubr.f32.gmra.mxu0 %v431
  %v1060 = vpop.f32.mrf.mxu0
  %v1061 = vadd.f32 %v157, %v1060
  %v1062 = vpop.f32.mrf.mxu0
  %1063 = vmatprep.mubr.f32.mxu0 0.0
  %1064 = vmatmul.mubr.f32.gmra.mxu0 %v434
  %v1065 = vpop.f32.mrf.mxu0
  %v1066 = vadd.f32 %v157, %v1065
  %v1067 = vpop.f32.mrf.mxu0
  %1068 = vmatprep.mubr.f32.mxu0 0.0
  %1069 = vmatmul.mubr.f32.gmra.mxu0 %v437
  %v1070 = vpop.f32.mrf.mxu0
  %v1071 = vadd.f32 %v157, %v1070
  %v1072 = vpop.f32.mrf.mxu0
  %1073 = vmatprep.mubr.f32.mxu0 0.0
  %1074 = vmatmul.mubr.f32.gmra.mxu0 %v440
  %v1075 = vpop.f32.mrf.mxu0
  %v1076 = vadd.f32 %v157, %v1075
  %v1077 = vpop.f32.mrf.mxu0
  %1078 = vmatprep.mubr.f32.mxu0 0.0
  %1079 = vmatmul.mubr.f32.gmra.mxu0 %v443
  %v1080 = vpop.f32.mrf.mxu0
  %v1081 = vadd.f32 %v157, %v1080
  %v1082 = vpop.f32.mrf.mxu0
  %1083 = vmatprep.mubr.f32.mxu0 0.0
  %1084 = vmatmul.mubr.f32.gmra.mxu0 %v446
  %v1085 = vpop.f32.mrf.mxu0
  %v1086 = vadd.f32 %v157, %v1085
  %v1087 = vpop.f32.mrf.mxu0
  %1088 = vmatprep.mubr.f32.mxu0 0.0
  %1089 = vmatmul.mubr.f32.gmra.mxu0 %v449
  %v1090 = vpop.f32.mrf.mxu0
  %v1091 = vadd.f32 %v157, %v1090
  %v1092 = vpop.f32.mrf.mxu0
  %1093 = vmatprep.mubr.f32.mxu0 0.0
  %1094 = vmatmul.mubr.f32.gmra.mxu0 %v452
  %v1095 = vpop.f32.mrf.mxu0
  %v1096 = vadd.f32 %v157, %v1095
  %v1097 = vpop.f32.mrf.mxu0
  %1098 = vmatprep.mubr.f32.mxu0 0.0
  %1099 = vmatmul.mubr.f32.gmra.mxu0 %v455
  %v1100 = vpop.f32.mrf.mxu0
  %v1101 = vadd.f32 %v157, %v1100
  %v1102 = vpop.f32.mrf.mxu0
  %1103 = vmatprep.mubr.f32.mxu0 0.0
  %1104 = vmatmul.mubr.f32.gmra.mxu0 %v458
  %v1105 = vpop.f32.mrf.mxu0
  %v1106 = vadd.f32 %v157, %v1105
  %v1107 = vpop.f32.mrf.mxu0
  %1108 = vmatprep.mubr.f32.mxu0 0.0
  %1109 = vmatmul.mubr.f32.gmra.mxu0 %v461
  %v1110 = vpop.f32.mrf.mxu0
  %v1111 = vadd.f32 %v157, %v1110
  %v1112 = vpop.f32.mrf.mxu0
  %1113 = vmatprep.mubr.f32.mxu0 0.0
  %1114 = vmatmul.mubr.f32.gmra.mxu0 %v464
  %v1115 = vpop.f32.mrf.mxu0
  %v1116 = vadd.f32 %v157, %v1115
  %v1117 = vpop.f32.mrf.mxu0
  %1118 = vmatprep.mubr.f32.mxu0 0.0
  %1119 = vmatmul.mubr.f32.gmra.mxu0 %v467
  %v1120 = vpop.f32.mrf.mxu0
  %v1121 = vadd.f32 %v157, %v1120
  %v1122 = vpop.f32.mrf.mxu0
  %1123 = vmatprep.mubr.f32.mxu0 0.0
  %1124 = vmatmul.mubr.f32.gmra.mxu0 %v470
  %v1125 = vpop.f32.mrf.mxu0
  %v1126 = vadd.f32 %v157, %v1125
  %v1127 = vpop.f32.mrf.mxu0
  %1128 = vmatprep.mubr.f32.mxu0 0.0
  %1129 = vmatmul.mubr.f32.gmra.mxu0 %v473
  %v1130 = vpop.f32.mrf.mxu0
  %v1131 = vadd.f32 %v157, %v1130
  %v1132 = vpop.f32.mrf.mxu0
  %1133 = vmatprep.mubr.f32.mxu0 0.0
  %1134 = vmatmul.mubr.f32.gmra.mxu0 %v476
  %v1135 = vpop.f32.mrf.mxu0
  %v1136 = vadd.f32 %v157, %v1135
  %v1137 = vpop.f32.mrf.mxu0
  %1138 = vmatprep.mubr.f32.mxu0 0.0
  %1139 = vmatmul.mubr.f32.gmra.mxu0 %v479
  %v1140 = vpop.f32.mrf.mxu0
  %v1141 = vadd.f32 %v157, %v1140
  %v1142 = vpop.f32.mrf.mxu0
  %1143 = vmatprep.mubr.f32.mxu0 0.0
  %1144 = vmatmul.mubr.f32.gmra.mxu0 %v482
  %v1145 = vpop.f32.mrf.mxu0
  %v1146 = vadd.f32 %v157, %v1145
  %v1147 = vpop.f32.mrf.mxu0
  %1148 = vmatprep.mubr.f32.mxu0 0.0
  %1149 = vmatmul.mubr.f32.gmra.mxu0 %v485
  %v1150 = vpop.f32.mrf.mxu0
  %v1151 = vadd.f32 %v157, %v1150
  %v1152 = vpop.f32.mrf.mxu0
  %1153 = vmatprep.mubr.f32.mxu0 0.0
  %1154 = vmatmul.mubr.f32.gmra.mxu0 %v488
  %v1155 = vpop.f32.mrf.mxu0
  %v1156 = vadd.f32 %v157, %v1155
  %v1157 = vpop.f32.mrf.mxu0
  %1158 = vmatprep.mubr.f32.mxu0 0.0
  %1159 = vmatmul.mubr.f32.gmra.mxu0 %v491
  %v1160 = vpop.f32.mrf.mxu0
  %v1161 = vadd.f32 %v157, %v1160
  %v1162 = vpop.f32.mrf.mxu0
  %1163 = vmatprep.mubr.f32.mxu0 0.0
  %1164 = vmatmul.mubr.f32.gmra.mxu0 %v494
  %v1165 = vpop.f32.mrf.mxu0
  %v1166 = vadd.f32 %v157, %v1165
  %v1167 = vpop.f32.mrf.mxu0
  %1168 = vmatprep.mubr.f32.mxu0 0.0
  %1169 = vmatmul.mubr.f32.gmra.mxu0 %v497
  %v1170 = vpop.f32.mrf.mxu0
  %v1171 = vadd.f32 %v157, %v1170
  %v1172 = vpop.f32.mrf.mxu0
  %1173 = vmatprep.mubr.f32.mxu0 0.0
  %1174 = vmatmul.mubr.f32.gmra.mxu0 %v500
  %v1175 = vpop.f32.mrf.mxu0
  %v1176 = vadd.f32 %v157, %v1175
  %v1177 = vpop.f32.mrf.mxu0
  %1178 = vmatprep.mubr.f32.mxu0 0.0
  %1179 = vmatmul.mubr.f32.gmra.mxu0 %v503
  %v1180 = vpop.f32.mrf.mxu0
  %v1181 = vadd.f32 %v157, %v1180
  %v1182 = vpop.f32.mrf.mxu0
  %1183 = vmatprep.mubr.f32.mxu0 0.0
  %1184 = vmatmul.mubr.f32.gmra.mxu0 %v506
  %v1185 = vpop.f32.mrf.mxu0
  %v1186 = vadd.f32 %v157, %v1185
  %v1187 = vpop.f32.mrf.mxu0
  %1188 = vmatprep.mubr.f32.mxu0 0.0
  %1189 = vmatmul.mubr.f32.gmra.mxu0 %v509
  %v1190 = vpop.f32.mrf.mxu0
  %v1191 = vadd.f32 %v157, %v1190
  %v1192 = vpop.f32.mrf.mxu0
  %1193 = vmatprep.mubr.f32.mxu0 0.0
  %1194 = vmatmul.mubr.f32.gmra.mxu0 %v512
  %v1195 = vpop.f32.mrf.mxu0
  %v1196 = vadd.f32 %v157, %v1195
  %v1197 = vpop.f32.mrf.mxu0
  %1198 = vmatprep.mubr.f32.mxu0 0.0
  %1199 = vmatmul.mubr.f32.gmra.mxu0 %v515
  %v1200 = vpop.f32.mrf.mxu0
  %v1201 = vadd.f32 %v157, %v1200
  %v1202 = vpop.f32.mrf.mxu0
  %1203 = vmatprep.mubr.f32.mxu0 0.0
  %1204 = vmatmul.mubr.f32.gmra.mxu0 %v518
  %v1205 = vpop.f32.mrf.mxu0
  %v1206 = vadd.f32 %v157, %v1205
  %v1207 = vpop.f32.mrf.mxu0
  %1208 = vmatprep.mubr.f32.mxu0 0.0
  %1209 = vmatmul.mubr.f32.gmra.mxu0 %v521
  %v1210 = vpop.f32.mrf.mxu0
  %v1211 = vadd.f32 %v157, %v1210
  %v1212 = vpop.f32.mrf.mxu0
  %1213 = vmatprep.mubr.f32.mxu0 0.0
  %1214 = vmatmul.mubr.f32.gmra.mxu0 %v524
  %v1215 = vpop.f32.mrf.mxu0
  %v1216 = vadd.f32 %v157, %v1215
  %v1217 = vpop.f32.mrf.mxu0
  %1218 = vmatprep.mubr.f32.mxu0 0.0
  %1219 = vmatmul.mubr.f32.gmra.mxu0 %v527
  %v1220 = vpop.f32.mrf.mxu0
  %v1221 = vadd.f32 %v157, %v1220
  %v1222 = vpop.f32.mrf.mxu0
  %1223 = vmatprep.mubr.f32.mxu0 0.0
  %1224 = vmatmul.mubr.f32.gmra.mxu0 %v530
  %v1225 = vpop.f32.mrf.mxu0
  %v1226 = vadd.f32 %v157, %v1225
  %v1227 = vpop.f32.mrf.mxu0
  %1228 = vmatprep.mubr.f32.mxu0 0.0
  %1229 = vmatmul.mubr.f32.gmra.mxu0 %v533
  %v1230 = vpop.f32.mrf.mxu0
  %v1231 = vadd.f32 %v157, %v1230
  %v1232 = vpop.f32.mrf.mxu0
  %1233 = vmatprep.mubr.f32.mxu0 0.0
  %1234 = vmatmul.mubr.f32.gmra.mxu0 %v536
  %v1235 = vpop.f32.mrf.mxu0
  %v1236 = vadd.f32 %v157, %v1235
  %v1237 = vpop.f32.mrf.mxu0
  %1238 = vmatprep.mubr.f32.mxu0 0.0
  %1239 = vmatmul.mubr.f32.gmra.mxu0 %v539
  %v1240 = vpop.f32.mrf.mxu0
  %v1241 = vadd.f32 %v157, %v1240
  %v1242 = vpop.f32.mrf.mxu0
  %1243 = vmatprep.mubr.f32.mxu0 0.0
  %1244 = vmatmul.mubr.f32.gmra.mxu0 %v542
  %v1245 = vpop.f32.mrf.mxu0
  %v1246 = vadd.f32 %v157, %v1245
  %v1247 = vpop.f32.mrf.mxu0
  %1248 = vdwg.mxu0
  %vm1249 = vcmask 261120
  %1250 = vst.msk [vmem:[%s3] sm:$0xff] %vm1249, %v611
  %1251 = vst.msk [vmem:[%s3 + $0x8] sm:$0xff] %vm1249, %v616
  %1252 = vst.msk [vmem:[%s3 + $0x10] sm:$0xff] %vm1249, %v621
  %1253 = vst.msk [vmem:[%s3 + $0x18] sm:$0xff] %vm1249, %v626
  %1254 = vst.msk [vmem:[%s3 + $0x20] sm:$0xff] %vm1249, %v631
  %1255 = vst.msk [vmem:[%s3 + $0x28] sm:$0xff] %vm1249, %v636
  %1256 = vst.msk [vmem:[%s3 + $0x30] sm:$0xff] %vm1249, %v641
  %1257 = vst.msk [vmem:[%s3 + $0x38] sm:$0xff] %vm1249, %v646
  %1258 = vst.msk [vmem:[%s3 + $0x40] sm:$0xff] %vm1249, %v651
  %1259 = vst.msk [vmem:[%s3 + $0x48] sm:$0xff] %vm1249, %v656
  %1260 = vst.msk [vmem:[%s3 + $0x50] sm:$0xff] %vm1249, %v661
  %1261 = vst.msk [vmem:[%s3 + $0x58] sm:$0xff] %vm1249, %v666
  %1262 = vst.msk [vmem:[%s3 + $0x60] sm:$0xff] %vm1249, %v671
  %1263 = vst.msk [vmem:[%s3 + $0x68] sm:$0xff] %vm1249, %v676
  %1264 = vst.msk [vmem:[%s3 + $0x70] sm:$0xff] %vm1249, %v681
  %1265 = vst.msk [vmem:[%s3 + $0x78] sm:$0xff] %vm1249, %v686
  %1266 = vst.msk [vmem:[%s3 + $0x80] sm:$0xff] %vm1249, %v691
  %1267 = vst.msk [vmem:[%s3 + $0x88] sm:$0xff] %vm1249, %v696
  %1268 = vst.msk [vmem:[%s3 + $0x90] sm:$0xff] %vm1249, %v701
  %1269 = vst.msk [vmem:[%s3 + $0x98] sm:$0xff] %vm1249, %v706
  %1270 = vst.msk [vmem:[%s3 + $0xa0] sm:$0xff] %vm1249, %v711
  %1271 = vst.msk [vmem:[%s3 + $0xa8] sm:$0xff] %vm1249, %v716
  %1272 = vst.msk [vmem:[%s3 + $0xb0] sm:$0xff] %vm1249, %v721
  %1273 = vst.msk [vmem:[%s3 + $0xb8] sm:$0xff] %vm1249, %v726
  %1274 = vst.msk [vmem:[%s3 + $0xc0] sm:$0xff] %vm1249, %v731
  %1275 = vst.msk [vmem:[%s3 + $0xc8] sm:$0xff] %vm1249, %v736
  %1276 = vst.msk [vmem:[%s3 + $0xd0] sm:$0xff] %vm1249, %v741
  %1277 = vst.msk [vmem:[%s3 + $0xd8] sm:$0xff] %vm1249, %v746
  %1278 = vst.msk [vmem:[%s3 + $0xe0] sm:$0xff] %vm1249, %v751
  %1279 = vst.msk [vmem:[%s3 + $0xe8] sm:$0xff] %vm1249, %v756
  %1280 = vst.msk [vmem:[%s3 + $0xf0] sm:$0xff] %vm1249, %v761
  %1281 = vst.msk [vmem:[%s3 + $0xf8] sm:$0xff] %vm1249, %v766
  %1282 = vst.msk [vmem:[%s3 + $0x100] sm:$0xff] %vm1249, %v771
  %1283 = vst.msk [vmem:[%s3 + $0x108] sm:$0xff] %vm1249, %v776
  %1284 = vst.msk [vmem:[%s3 + $0x110] sm:$0xff] %vm1249, %v781
  %1285 = vst.msk [vmem:[%s3 + $0x118] sm:$0xff] %vm1249, %v786
  %1286 = vst.msk [vmem:[%s3 + $0x120] sm:$0xff] %vm1249, %v791
  %1287 = vst.msk [vmem:[%s3 + $0x128] sm:$0xff] %vm1249, %v796
  %1288 = vst.msk [vmem:[%s3 + $0x130] sm:$0xff] %vm1249, %v801
  %1289 = vst.msk [vmem:[%s3 + $0x138] sm:$0xff] %vm1249, %v806
  %1290 = vst.msk [vmem:[%s3 + $0x140] sm:$0xff] %vm1249, %v811
  %1291 = vst.msk [vmem:[%s3 + $0x148] sm:$0xff] %vm1249, %v816
  %1292 = vst.msk [vmem:[%s3 + $0x150] sm:$0xff] %vm1249, %v821
  %1293 = vst.msk [vmem:[%s3 + $0x158] sm:$0xff] %vm1249, %v826
  %1294 = vst.msk [vmem:[%s3 + $0x160] sm:$0xff] %vm1249, %v831
  %1295 = vst.msk [vmem:[%s3 + $0x168] sm:$0xff] %vm1249, %v836
  %1296 = vst.msk [vmem:[%s3 + $0x170] sm:$0xff] %vm1249, %v841
  %1297 = vst.msk [vmem:[%s3 + $0x178] sm:$0xff] %vm1249, %v846
  %1298 = vst.msk [vmem:[%s3 + $0x180] sm:$0xff] %vm1249, %v851
  %1299 = vst.msk [vmem:[%s3 + $0x188] sm:$0xff] %vm1249, %v856
  %1300 = vst.msk [vmem:[%s3 + $0x190] sm:$0xff] %vm1249, %v861
  %1301 = vst.msk [vmem:[%s3 + $0x198] sm:$0xff] %vm1249, %v866
  %1302 = vst.msk [vmem:[%s3 + $0x1a0] sm:$0xff] %vm1249, %v871
  %1303 = vst.msk [vmem:[%s3 + $0x1a8] sm:$0xff] %vm1249, %v876
  %1304 = vst.msk [vmem:[%s3 + $0x1b0] sm:$0xff] %vm1249, %v881
  %1305 = vst.msk [vmem:[%s3 + $0x1b8] sm:$0xff] %vm1249, %v886
  %1306 = vst.msk [vmem:[%s3 + $0x1c0] sm:$0xff] %vm1249, %v891
  %1307 = vst.msk [vmem:[%s3 + $0x1c8] sm:$0xff] %vm1249, %v896
  %1308 = vst.msk [vmem:[%s3 + $0x1d0] sm:$0xff] %vm1249, %v901
  %1309 = vst.msk [vmem:[%s3 + $0x1d8] sm:$0xff] %vm1249, %v906
  %1310 = vst.msk [vmem:[%s3 + $0x1e0] sm:$0xff] %vm1249, %v911
  %1311 = vst.msk [vmem:[%s3 + $0x1e8] sm:$0xff] %vm1249, %v916
  %1312 = vst.msk [vmem:[%s3 + $0x1f0] sm:$0xff] %vm1249, %v921
  %1313 = vst.msk [vmem:[%s3 + $0x1f8] sm:$0xff] %vm1249, %v926
  %1314 = vst.msk [vmem:[%s3 + $0x200] sm:$0xff] %vm1249, %v931
  %1315 = vst.msk [vmem:[%s3 + $0x208] sm:$0xff] %vm1249, %v936
  %1316 = vst.msk [vmem:[%s3 + $0x210] sm:$0xff] %vm1249, %v941
  %1317 = vst.msk [vmem:[%s3 + $0x218] sm:$0xff] %vm1249, %v946
  %1318 = vst.msk [vmem:[%s3 + $0x220] sm:$0xff] %vm1249, %v951
  %1319 = vst.msk [vmem:[%s3 + $0x228] sm:$0xff] %vm1249, %v956
  %1320 = vst.msk [vmem:[%s3 + $0x230] sm:$0xff] %vm1249, %v961
  %1321 = vst.msk [vmem:[%s3 + $0x238] sm:$0xff] %vm1249, %v966
  %1322 = vst.msk [vmem:[%s3 + $0x240] sm:$0xff] %vm1249, %v971
  %1323 = vst.msk [vmem:[%s3 + $0x248] sm:$0xff] %vm1249, %v976
  %1324 = vst.msk [vmem:[%s3 + $0x250] sm:$0xff] %vm1249, %v981
  %1325 = vst.msk [vmem:[%s3 + $0x258] sm:$0xff] %vm1249, %v986
  %1326 = vst.msk [vmem:[%s3 + $0x260] sm:$0xff] %vm1249, %v991
  %1327 = vst.msk [vmem:[%s3 + $0x268] sm:$0xff] %vm1249, %v996
  %1328 = vst.msk [vmem:[%s3 + $0x270] sm:$0xff] %vm1249, %v1001
  %1329 = vst.msk [vmem:[%s3 + $0x278] sm:$0xff] %vm1249, %v1006
  %1330 = vst.msk [vmem:[%s3 + $0x280] sm:$0xff] %vm1249, %v1011
  %1331 = vst.msk [vmem:[%s3 + $0x288] sm:$0xff] %vm1249, %v1016
  %1332 = vst.msk [vmem:[%s3 + $0x290] sm:$0xff] %vm1249, %v1021
  %1333 = vst.msk [vmem:[%s3 + $0x298] sm:$0xff] %vm1249, %v1026
  %1334 = vst.msk [vmem:[%s3 + $0x2a0] sm:$0xff] %vm1249, %v1031
  %1335 = vst.msk [vmem:[%s3 + $0x2a8] sm:$0xff] %vm1249, %v1036
  %1336 = vst.msk [vmem:[%s3 + $0x2b0] sm:$0xff] %vm1249, %v1041
  %1337 = vst.msk [vmem:[%s3 + $0x2b8] sm:$0xff] %vm1249, %v1046
  %1338 = vst.msk [vmem:[%s3 + $0x2c0] sm:$0xff] %vm1249, %v1051
  %1339 = vst.msk [vmem:[%s3 + $0x2c8] sm:$0xff] %vm1249, %v1056
  %1340 = vst.msk [vmem:[%s3 + $0x2d0] sm:$0xff] %vm1249, %v1061
  %1341 = vst.msk [vmem:[%s3 + $0x2d8] sm:$0xff] %vm1249, %v1066
  %1342 = vst.msk [vmem:[%s3 + $0x2e0] sm:$0xff] %vm1249, %v1071
  %1343 = vst.msk [vmem:[%s3 + $0x2e8] sm:$0xff] %vm1249, %v1076
  %1344 = vst.msk [vmem:[%s3 + $0x2f0] sm:$0xff] %vm1249, %v1081
  %1345 = vst.msk [vmem:[%s3 + $0x2f8] sm:$0xff] %vm1249, %v1086
  %1346 = vst.msk [vmem:[%s3 + $0x300] sm:$0xff] %vm1249, %v1091
  %1347 = vst.msk [vmem:[%s3 + $0x308] sm:$0xff] %vm1249, %v1096
  %1348 = vst.msk [vmem:[%s3 + $0x310] sm:$0xff] %vm1249, %v1101
  %1349 = vst.msk [vmem:[%s3 + $0x318] sm:$0xff] %vm1249, %v1106
  %1350 = vst.msk [vmem:[%s3 + $0x320] sm:$0xff] %vm1249, %v1111
  %1351 = vst.msk [vmem:[%s3 + $0x328] sm:$0xff] %vm1249, %v1116
  %1352 = vst.msk [vmem:[%s3 + $0x330] sm:$0xff] %vm1249, %v1121
  %1353 = vst.msk [vmem:[%s3 + $0x338] sm:$0xff] %vm1249, %v1126
  %1354 = vst.msk [vmem:[%s3 + $0x340] sm:$0xff] %vm1249, %v1131
  %1355 = vst.msk [vmem:[%s3 + $0x348] sm:$0xff] %vm1249, %v1136
  %1356 = vst.msk [vmem:[%s3 + $0x350] sm:$0xff] %vm1249, %v1141
  %1357 = vst.msk [vmem:[%s3 + $0x358] sm:$0xff] %vm1249, %v1146
  %1358 = vst.msk [vmem:[%s3 + $0x360] sm:$0xff] %vm1249, %v1151
  %1359 = vst.msk [vmem:[%s3 + $0x368] sm:$0xff] %vm1249, %v1156
  %1360 = vst.msk [vmem:[%s3 + $0x370] sm:$0xff] %vm1249, %v1161
  %1361 = vst.msk [vmem:[%s3 + $0x378] sm:$0xff] %vm1249, %v1166
  %1362 = vst.msk [vmem:[%s3 + $0x380] sm:$0xff] %vm1249, %v1171
  %1363 = vst.msk [vmem:[%s3 + $0x388] sm:$0xff] %vm1249, %v1176
  %1364 = vst.msk [vmem:[%s3 + $0x390] sm:$0xff] %vm1249, %v1181
  %1365 = vst.msk [vmem:[%s3 + $0x398] sm:$0xff] %vm1249, %v1186
  %1366 = vst.msk [vmem:[%s3 + $0x3a0] sm:$0xff] %vm1249, %v1191
  %1367 = vst.msk [vmem:[%s3 + $0x3a8] sm:$0xff] %vm1249, %v1196
  %1368 = vst.msk [vmem:[%s3 + $0x3b0] sm:$0xff] %vm1249, %v1201
  %1369 = vst.msk [vmem:[%s3 + $0x3b8] sm:$0xff] %vm1249, %v1206
  %1370 = vst.msk [vmem:[%s3 + $0x3c0] sm:$0xff] %vm1249, %v1211
  %1371 = vst.msk [vmem:[%s3 + $0x3c8] sm:$0xff] %vm1249, %v1216
  %1372 = vst.msk [vmem:[%s3 + $0x3d0] sm:$0xff] %vm1249, %v1221
  %1373 = vst.msk [vmem:[%s3 + $0x3d8] sm:$0xff] %vm1249, %v1226
  %1374 = vst.msk [vmem:[%s3 + $0x3e0] sm:$0xff] %vm1249, %v1231
  %1375 = vst.msk [vmem:[%s3 + $0x3e8] sm:$0xff] %vm1249, %v1236
  %1376 = vst.msk [vmem:[%s3 + $0x3f0] sm:$0xff] %vm1249, %v1241
  %1377 = vst.msk [vmem:[%s3 + $0x3f8] sm:$0xff] %vm1249, %v1246
  %1506 = vrot.lane.b32.xlu0 %v611, 96
  %v1507 = vpop.permute.xlu0 %1506
  %1508 = vrot.lane.b32.xlu0 %v616, 96
  %v1509 = vpop.permute.xlu0 %1508
  %1510 = vrot.lane.b32.xlu0 %v621, 96
  %v1511 = vpop.permute.xlu0 %1510
  %1512 = vrot.lane.b32.xlu0 %v626, 96
  %v1513 = vpop.permute.xlu0 %1512
  %1514 = vrot.lane.b32.xlu0 %v631, 96
  %v1515 = vpop.permute.xlu0 %1514
  %1516 = vrot.lane.b32.xlu0 %v636, 96
  %v1517 = vpop.permute.xlu0 %1516
  %1518 = vrot.lane.b32.xlu0 %v641, 96
  %v1519 = vpop.permute.xlu0 %1518
  %1520 = vrot.lane.b32.xlu0 %v646, 96
  %v1521 = vpop.permute.xlu0 %1520
  %1522 = vrot.lane.b32.xlu0 %v651, 96
  %v1523 = vpop.permute.xlu0 %1522
  %1524 = vrot.lane.b32.xlu0 %v656, 96
  %v1525 = vpop.permute.xlu0 %1524
  %1526 = vrot.lane.b32.xlu0 %v661, 96
  %v1527 = vpop.permute.xlu0 %1526
  %1528 = vrot.lane.b32.xlu0 %v666, 96
  %v1529 = vpop.permute.xlu0 %1528
  %1530 = vrot.lane.b32.xlu0 %v671, 96
  %v1531 = vpop.permute.xlu0 %1530
  %1532 = vrot.lane.b32.xlu0 %v676, 96
  %v1533 = vpop.permute.xlu0 %1532
  %1534 = vrot.lane.b32.xlu0 %v681, 96
  %v1535 = vpop.permute.xlu0 %1534
  %1536 = vrot.lane.b32.xlu0 %v686, 96
  %v1537 = vpop.permute.xlu0 %1536
  %1538 = vrot.lane.b32.xlu0 %v691, 96
  %v1539 = vpop.permute.xlu0 %1538
  %1540 = vrot.lane.b32.xlu0 %v696, 96
  %v1541 = vpop.permute.xlu0 %1540
  %1542 = vrot.lane.b32.xlu0 %v701, 96
  %v1543 = vpop.permute.xlu0 %1542
  %1544 = vrot.lane.b32.xlu0 %v706, 96
  %v1545 = vpop.permute.xlu0 %1544
  %1546 = vrot.lane.b32.xlu0 %v711, 96
  %v1547 = vpop.permute.xlu0 %1546
  %1548 = vrot.lane.b32.xlu0 %v716, 96
  %v1549 = vpop.permute.xlu0 %1548
  %1550 = vrot.lane.b32.xlu0 %v721, 96
  %v1551 = vpop.permute.xlu0 %1550
  %1552 = vrot.lane.b32.xlu0 %v726, 96
  %v1553 = vpop.permute.xlu0 %1552
  %1554 = vrot.lane.b32.xlu0 %v731, 96
  %v1555 = vpop.permute.xlu0 %1554
  %1556 = vrot.lane.b32.xlu0 %v736, 96
  %v1557 = vpop.permute.xlu0 %1556
  %1558 = vrot.lane.b32.xlu0 %v741, 96
  %v1559 = vpop.permute.xlu0 %1558
  %1560 = vrot.lane.b32.xlu0 %v746, 96
  %v1561 = vpop.permute.xlu0 %1560
  %1562 = vrot.lane.b32.xlu0 %v751, 96
  %v1563 = vpop.permute.xlu0 %1562
  %1564 = vrot.lane.b32.xlu0 %v756, 96
  %v1565 = vpop.permute.xlu0 %1564
  %1566 = vrot.lane.b32.xlu0 %v761, 96
  %v1567 = vpop.permute.xlu0 %1566
  %1568 = vrot.lane.b32.xlu0 %v766, 96
  %v1569 = vpop.permute.xlu0 %1568
  %1570 = vrot.lane.b32.xlu0 %v771, 96
  %v1571 = vpop.permute.xlu0 %1570
  %1572 = vrot.lane.b32.xlu0 %v776, 96
  %v1573 = vpop.permute.xlu0 %1572
  %1574 = vrot.lane.b32.xlu0 %v781, 96
  %v1575 = vpop.permute.xlu0 %1574
  %1576 = vrot.lane.b32.xlu0 %v786, 96
  %v1577 = vpop.permute.xlu0 %1576
  %1578 = vrot.lane.b32.xlu0 %v791, 96
  %v1579 = vpop.permute.xlu0 %1578
  %1580 = vrot.lane.b32.xlu0 %v796, 96
  %v1581 = vpop.permute.xlu0 %1580
  %1582 = vrot.lane.b32.xlu0 %v801, 96
  %v1583 = vpop.permute.xlu0 %1582
  %1584 = vrot.lane.b32.xlu0 %v806, 96
  %v1585 = vpop.permute.xlu0 %1584
  %1586 = vrot.lane.b32.xlu0 %v811, 96
  %v1587 = vpop.permute.xlu0 %1586
  %1588 = vrot.lane.b32.xlu0 %v816, 96
  %v1589 = vpop.permute.xlu0 %1588
  %1590 = vrot.lane.b32.xlu0 %v821, 96
  %v1591 = vpop.permute.xlu0 %1590
  %1592 = vrot.lane.b32.xlu0 %v826, 96
  %v1593 = vpop.permute.xlu0 %1592
  %1594 = vrot.lane.b32.xlu0 %v831, 96
  %v1595 = vpop.permute.xlu0 %1594
  %1596 = vrot.lane.b32.xlu0 %v836, 96
  %v1597 = vpop.permute.xlu0 %1596
  %1598 = vrot.lane.b32.xlu0 %v841, 96
  %v1599 = vpop.permute.xlu0 %1598
  %1600 = vrot.lane.b32.xlu0 %v846, 96
  %v1601 = vpop.permute.xlu0 %1600
  %1602 = vrot.lane.b32.xlu0 %v851, 96
  %v1603 = vpop.permute.xlu0 %1602
  %1604 = vrot.lane.b32.xlu0 %v856, 96
  %v1605 = vpop.permute.xlu0 %1604
  %1606 = vrot.lane.b32.xlu0 %v861, 96
  %v1607 = vpop.permute.xlu0 %1606
  %1608 = vrot.lane.b32.xlu0 %v866, 96
  %v1609 = vpop.permute.xlu0 %1608
  %1610 = vrot.lane.b32.xlu0 %v871, 96
  %v1611 = vpop.permute.xlu0 %1610
  %1612 = vrot.lane.b32.xlu0 %v876, 96
  %v1613 = vpop.permute.xlu0 %1612
  %1614 = vrot.lane.b32.xlu0 %v881, 96
  %v1615 = vpop.permute.xlu0 %1614
  %1616 = vrot.lane.b32.xlu0 %v886, 96
  %v1617 = vpop.permute.xlu0 %1616
  %1618 = vrot.lane.b32.xlu0 %v891, 96
  %v1619 = vpop.permute.xlu0 %1618
  %1620 = vrot.lane.b32.xlu0 %v896, 96
  %v1621 = vpop.permute.xlu0 %1620
  %1622 = vrot.lane.b32.xlu0 %v901, 96
  %v1623 = vpop.permute.xlu0 %1622
  %1624 = vrot.lane.b32.xlu0 %v906, 96
  %v1625 = vpop.permute.xlu0 %1624
  %1626 = vrot.lane.b32.xlu0 %v911, 96
  %v1627 = vpop.permute.xlu0 %1626
  %1628 = vrot.lane.b32.xlu0 %v916, 96
  %v1629 = vpop.permute.xlu0 %1628
  %1630 = vrot.lane.b32.xlu0 %v921, 96
  %v1631 = vpop.permute.xlu0 %1630
  %1632 = vrot.lane.b32.xlu0 %v926, 96
  %v1633 = vpop.permute.xlu0 %1632
  %1634 = vrot.lane.b32.xlu0 %v931, 96
  %v1635 = vpop.permute.xlu0 %1634
  %1636 = vrot.lane.b32.xlu0 %v936, 96
  %v1637 = vpop.permute.xlu0 %1636
  %1638 = vrot.lane.b32.xlu0 %v941, 96
  %v1639 = vpop.permute.xlu0 %1638
  %1640 = vrot.lane.b32.xlu0 %v946, 96
  %v1641 = vpop.permute.xlu0 %1640
  %1642 = vrot.lane.b32.xlu0 %v951, 96
  %v1643 = vpop.permute.xlu0 %1642
  %1644 = vrot.lane.b32.xlu0 %v956, 96
  %v1645 = vpop.permute.xlu0 %1644
  %1646 = vrot.lane.b32.xlu0 %v961, 96
  %v1647 = vpop.permute.xlu0 %1646
  %1648 = vrot.lane.b32.xlu0 %v966, 96
  %v1649 = vpop.permute.xlu0 %1648
  %1650 = vrot.lane.b32.xlu0 %v971, 96
  %v1651 = vpop.permute.xlu0 %1650
  %1652 = vrot.lane.b32.xlu0 %v976, 96
  %v1653 = vpop.permute.xlu0 %1652
  %1654 = vrot.lane.b32.xlu0 %v981, 96
  %v1655 = vpop.permute.xlu0 %1654
  %1656 = vrot.lane.b32.xlu0 %v986, 96
  %v1657 = vpop.permute.xlu0 %1656
  %1658 = vrot.lane.b32.xlu0 %v991, 96
  %v1659 = vpop.permute.xlu0 %1658
  %1660 = vrot.lane.b32.xlu0 %v996, 96
  %v1661 = vpop.permute.xlu0 %1660
  %1662 = vrot.lane.b32.xlu0 %v1001, 96
  %v1663 = vpop.permute.xlu0 %1662
  %1664 = vrot.lane.b32.xlu0 %v1006, 96
  %v1665 = vpop.permute.xlu0 %1664
  %1666 = vrot.lane.b32.xlu0 %v1011, 96
  %v1667 = vpop.permute.xlu0 %1666
  %1668 = vrot.lane.b32.xlu0 %v1016, 96
  %v1669 = vpop.permute.xlu0 %1668
  %1670 = vrot.lane.b32.xlu0 %v1021, 96
  %v1671 = vpop.permute.xlu0 %1670
  %1672 = vrot.lane.b32.xlu0 %v1026, 96
  %v1673 = vpop.permute.xlu0 %1672
  %1674 = vrot.lane.b32.xlu0 %v1031, 96
  %v1675 = vpop.permute.xlu0 %1674
  %1676 = vrot.lane.b32.xlu0 %v1036, 96
  %v1677 = vpop.permute.xlu0 %1676
  %1678 = vrot.lane.b32.xlu0 %v1041, 96
  %v1679 = vpop.permute.xlu0 %1678
  %1680 = vrot.lane.b32.xlu0 %v1046, 96
  %v1681 = vpop.permute.xlu0 %1680
  %1682 = vrot.lane.b32.xlu0 %v1051, 96
  %v1683 = vpop.permute.xlu0 %1682
  %1684 = vrot.lane.b32.xlu0 %v1056, 96
  %v1685 = vpop.permute.xlu0 %1684
  %1686 = vrot.lane.b32.xlu0 %v1061, 96
  %v1687 = vpop.permute.xlu0 %1686
  %1688 = vrot.lane.b32.xlu0 %v1066, 96
  %v1689 = vpop.permute.xlu0 %1688
  %1690 = vrot.lane.b32.xlu0 %v1071, 96
  %v1691 = vpop.permute.xlu0 %1690
  %1692 = vrot.lane.b32.xlu0 %v1076, 96
  %v1693 = vpop.permute.xlu0 %1692
  %1694 = vrot.lane.b32.xlu0 %v1081, 96
  %v1695 = vpop.permute.xlu0 %1694
  %1696 = vrot.lane.b32.xlu0 %v1086, 96
  %v1697 = vpop.permute.xlu0 %1696
  %1698 = vrot.lane.b32.xlu0 %v1091, 96
  %v1699 = vpop.permute.xlu0 %1698
  %1700 = vrot.lane.b32.xlu0 %v1096, 96
  %v1701 = vpop.permute.xlu0 %1700
  %1702 = vrot.lane.b32.xlu0 %v1101, 96
  %v1703 = vpop.permute.xlu0 %1702
  %1704 = vrot.lane.b32.xlu0 %v1106, 96
  %v1705 = vpop.permute.xlu0 %1704
  %1706 = vrot.lane.b32.xlu0 %v1111, 96
  %v1707 = vpop.permute.xlu0 %1706
  %1708 = vrot.lane.b32.xlu0 %v1116, 96
  %v1709 = vpop.permute.xlu0 %1708
  %1710 = vrot.lane.b32.xlu0 %v1121, 96
  %v1711 = vpop.permute.xlu0 %1710
  %1712 = vrot.lane.b32.xlu0 %v1126, 96
  %v1713 = vpop.permute.xlu0 %1712
  %1714 = vrot.lane.b32.xlu0 %v1131, 96
  %v1715 = vpop.permute.xlu0 %1714
  %1716 = vrot.lane.b32.xlu0 %v1136, 96
  %v1717 = vpop.permute.xlu0 %1716
  %1718 = vrot.lane.b32.xlu0 %v1141, 96
  %v1719 = vpop.permute.xlu0 %1718
  %1720 = vrot.lane.b32.xlu0 %v1146, 96
  %v1721 = vpop.permute.xlu0 %1720
  %1722 = vrot.lane.b32.xlu0 %v1151, 96
  %v1723 = vpop.permute.xlu0 %1722
  %1724 = vrot.lane.b32.xlu0 %v1156, 96
  %v1725 = vpop.permute.xlu0 %1724
  %1726 = vrot.lane.b32.xlu0 %v1161, 96
  %v1727 = vpop.permute.xlu0 %1726
  %1728 = vrot.lane.b32.xlu0 %v1166, 96
  %v1729 = vpop.permute.xlu0 %1728
  %1730 = vrot.lane.b32.xlu0 %v1171, 96
  %v1731 = vpop.permute.xlu0 %1730
  %1732 = vrot.lane.b32.xlu0 %v1176, 96
  %v1733 = vpop.permute.xlu0 %1732
  %1734 = vrot.lane.b32.xlu0 %v1181, 96
  %v1735 = vpop.permute.xlu0 %1734
  %1736 = vrot.lane.b32.xlu0 %v1186, 96
  %v1737 = vpop.permute.xlu0 %1736
  %1738 = vrot.lane.b32.xlu0 %v1191, 96
  %v1739 = vpop.permute.xlu0 %1738
  %1740 = vrot.lane.b32.xlu0 %v1196, 96
  %v1741 = vpop.permute.xlu0 %1740
  %1742 = vrot.lane.b32.xlu0 %v1201, 96
  %v1743 = vpop.permute.xlu0 %1742
  %1744 = vrot.lane.b32.xlu0 %v1206, 96
  %v1745 = vpop.permute.xlu0 %1744
  %1746 = vrot.lane.b32.xlu0 %v1211, 96
  %v1747 = vpop.permute.xlu0 %1746
  %1748 = vrot.lane.b32.xlu0 %v1216, 96
  %v1749 = vpop.permute.xlu0 %1748
  %1750 = vrot.lane.b32.xlu0 %v1221, 96
  %v1751 = vpop.permute.xlu0 %1750
  %1752 = vrot.lane.b32.xlu0 %v1226, 96
  %v1753 = vpop.permute.xlu0 %1752
  %1754 = vrot.lane.b32.xlu0 %v1231, 96
  %v1755 = vpop.permute.xlu0 %1754
  %1756 = vrot.lane.b32.xlu0 %v1236, 96
  %v1757 = vpop.permute.xlu0 %1756
  %1758 = vrot.lane.b32.xlu0 %v1241, 96
  %v1759 = vpop.permute.xlu0 %1758
  %1760 = vrot.lane.b32.xlu0 %v1246, 96
  %v1761 = vpop.permute.xlu0 %1760
  %1890 = vst.msk [vmem:[%s4] sm:$0xff] %vm1249, %v1507
  %1891 = vst.msk [vmem:[%s4 + $0x8] sm:$0xff] %vm1249, %v1509
  %1892 = vst.msk [vmem:[%s4 + $0x10] sm:$0xff] %vm1249, %v1511
  %1893 = vst.msk [vmem:[%s4 + $0x18] sm:$0xff] %vm1249, %v1513
  %1894 = vst.msk [vmem:[%s4 + $0x20] sm:$0xff] %vm1249, %v1515
  %1895 = vst.msk [vmem:[%s4 + $0x28] sm:$0xff] %vm1249, %v1517
  %1896 = vst.msk [vmem:[%s4 + $0x30] sm:$0xff] %vm1249, %v1519
  %1897 = vst.msk [vmem:[%s4 + $0x38] sm:$0xff] %vm1249, %v1521
  %1898 = vst.msk [vmem:[%s4 + $0x40] sm:$0xff] %vm1249, %v1523
  %1899 = vst.msk [vmem:[%s4 + $0x48] sm:$0xff] %vm1249, %v1525
  %1900 = vst.msk [vmem:[%s4 + $0x50] sm:$0xff] %vm1249, %v1527
  %1901 = vst.msk [vmem:[%s4 + $0x58] sm:$0xff] %vm1249, %v1529
  %1902 = vst.msk [vmem:[%s4 + $0x60] sm:$0xff] %vm1249, %v1531
  %1903 = vst.msk [vmem:[%s4 + $0x68] sm:$0xff] %vm1249, %v1533
  %1904 = vst.msk [vmem:[%s4 + $0x70] sm:$0xff] %vm1249, %v1535
  %1905 = vst.msk [vmem:[%s4 + $0x78] sm:$0xff] %vm1249, %v1537
  %1906 = vst.msk [vmem:[%s4 + $0x80] sm:$0xff] %vm1249, %v1539
  %1907 = vst.msk [vmem:[%s4 + $0x88] sm:$0xff] %vm1249, %v1541
  %1908 = vst.msk [vmem:[%s4 + $0x90] sm:$0xff] %vm1249, %v1543
  %1909 = vst.msk [vmem:[%s4 + $0x98] sm:$0xff] %vm1249, %v1545
  %1910 = vst.msk [vmem:[%s4 + $0xa0] sm:$0xff] %vm1249, %v1547
  %1911 = vst.msk [vmem:[%s4 + $0xa8] sm:$0xff] %vm1249, %v1549
  %1912 = vst.msk [vmem:[%s4 + $0xb0] sm:$0xff] %vm1249, %v1551
  %1913 = vst.msk [vmem:[%s4 + $0xb8] sm:$0xff] %vm1249, %v1553
  %1914 = vst.msk [vmem:[%s4 + $0xc0] sm:$0xff] %vm1249, %v1555
  %1915 = vst.msk [vmem:[%s4 + $0xc8] sm:$0xff] %vm1249, %v1557
  %1916 = vst.msk [vmem:[%s4 + $0xd0] sm:$0xff] %vm1249, %v1559
  %1917 = vst.msk [vmem:[%s4 + $0xd8] sm:$0xff] %vm1249, %v1561
  %1918 = vst.msk [vmem:[%s4 + $0xe0] sm:$0xff] %vm1249, %v1563
  %1919 = vst.msk [vmem:[%s4 + $0xe8] sm:$0xff] %vm1249, %v1565
  %1920 = vst.msk [vmem:[%s4 + $0xf0] sm:$0xff] %vm1249, %v1567
  %1921 = vst.msk [vmem:[%s4 + $0xf8] sm:$0xff] %vm1249, %v1569
  %1922 = vst.msk [vmem:[%s4 + $0x100] sm:$0xff] %vm1249, %v1571
  %1923 = vst.msk [vmem:[%s4 + $0x108] sm:$0xff] %vm1249, %v1573
  %1924 = vst.msk [vmem:[%s4 + $0x110] sm:$0xff] %vm1249, %v1575
  %1925 = vst.msk [vmem:[%s4 + $0x118] sm:$0xff] %vm1249, %v1577
  %1926 = vst.msk [vmem:[%s4 + $0x120] sm:$0xff] %vm1249, %v1579
  %1927 = vst.msk [vmem:[%s4 + $0x128] sm:$0xff] %vm1249, %v1581
  %1928 = vst.msk [vmem:[%s4 + $0x130] sm:$0xff] %vm1249, %v1583
  %1929 = vst.msk [vmem:[%s4 + $0x138] sm:$0xff] %vm1249, %v1585
  %1930 = vst.msk [vmem:[%s4 + $0x140] sm:$0xff] %vm1249, %v1587
  %1931 = vst.msk [vmem:[%s4 + $0x148] sm:$0xff] %vm1249, %v1589
  %1932 = vst.msk [vmem:[%s4 + $0x150] sm:$0xff] %vm1249, %v1591
  %1933 = vst.msk [vmem:[%s4 + $0x158] sm:$0xff] %vm1249, %v1593
  %1934 = vst.msk [vmem:[%s4 + $0x160] sm:$0xff] %vm1249, %v1595
  %1935 = vst.msk [vmem:[%s4 + $0x168] sm:$0xff] %vm1249, %v1597
  %1936 = vst.msk [vmem:[%s4 + $0x170] sm:$0xff] %vm1249, %v1599
  %1937 = vst.msk [vmem:[%s4 + $0x178] sm:$0xff] %vm1249, %v1601
  %1938 = vst.msk [vmem:[%s4 + $0x180] sm:$0xff] %vm1249, %v1603
  %1939 = vst.msk [vmem:[%s4 + $0x188] sm:$0xff] %vm1249, %v1605
  %1940 = vst.msk [vmem:[%s4 + $0x190] sm:$0xff] %vm1249, %v1607
  %1941 = vst.msk [vmem:[%s4 + $0x198] sm:$0xff] %vm1249, %v1609
  %1942 = vst.msk [vmem:[%s4 + $0x1a0] sm:$0xff] %vm1249, %v1611
  %1943 = vst.msk [vmem:[%s4 + $0x1a8] sm:$0xff] %vm1249, %v1613
  %1944 = vst.msk [vmem:[%s4 + $0x1b0] sm:$0xff] %vm1249, %v1615
  %1945 = vst.msk [vmem:[%s4 + $0x1b8] sm:$0xff] %vm1249, %v1617
  %1946 = vst.msk [vmem:[%s4 + $0x1c0] sm:$0xff] %vm1249, %v1619
  %1947 = vst.msk [vmem:[%s4 + $0x1c8] sm:$0xff] %vm1249, %v1621
  %1948 = vst.msk [vmem:[%s4 + $0x1d0] sm:$0xff] %vm1249, %v1623
  %1949 = vst.msk [vmem:[%s4 + $0x1d8] sm:$0xff] %vm1249, %v1625
  %1950 = vst.msk [vmem:[%s4 + $0x1e0] sm:$0xff] %vm1249, %v1627
  %1951 = vst.msk [vmem:[%s4 + $0x1e8] sm:$0xff] %vm1249, %v1629
  %1952 = vst.msk [vmem:[%s4 + $0x1f0] sm:$0xff] %vm1249, %v1631
  %1953 = vst.msk [vmem:[%s4 + $0x1f8] sm:$0xff] %vm1249, %v1633
  %1954 = vst.msk [vmem:[%s4 + $0x200] sm:$0xff] %vm1249, %v1635
  %1955 = vst.msk [vmem:[%s4 + $0x208] sm:$0xff] %vm1249, %v1637
  %1956 = vst.msk [vmem:[%s4 + $0x210] sm:$0xff] %vm1249, %v1639
  %1957 = vst.msk [vmem:[%s4 + $0x218] sm:$0xff] %vm1249, %v1641
  %1958 = vst.msk [vmem:[%s4 + $0x220] sm:$0xff] %vm1249, %v1643
  %1959 = vst.msk [vmem:[%s4 + $0x228] sm:$0xff] %vm1249, %v1645
  %1960 = vst.msk [vmem:[%s4 + $0x230] sm:$0xff] %vm1249, %v1647
  %1961 = vst.msk [vmem:[%s4 + $0x238] sm:$0xff] %vm1249, %v1649
  %1962 = vst.msk [vmem:[%s4 + $0x240] sm:$0xff] %vm1249, %v1651
  %1963 = vst.msk [vmem:[%s4 + $0x248] sm:$0xff] %vm1249, %v1653
  %1964 = vst.msk [vmem:[%s4 + $0x250] sm:$0xff] %vm1249, %v1655
  %1965 = vst.msk [vmem:[%s4 + $0x258] sm:$0xff] %vm1249, %v1657
  %1966 = vst.msk [vmem:[%s4 + $0x260] sm:$0xff] %vm1249, %v1659
  %1967 = vst.msk [vmem:[%s4 + $0x268] sm:$0xff] %vm1249, %v1661
  %1968 = vst.msk [vmem:[%s4 + $0x270] sm:$0xff] %vm1249, %v1663
  %1969 = vst.msk [vmem:[%s4 + $0x278] sm:$0xff] %vm1249, %v1665
  %1970 = vst.msk [vmem:[%s4 + $0x280] sm:$0xff] %vm1249, %v1667
  %1971 = vst.msk [vmem:[%s4 + $0x288] sm:$0xff] %vm1249, %v1669
  %1972 = vst.msk [vmem:[%s4 + $0x290] sm:$0xff] %vm1249, %v1671
  %1973 = vst.msk [vmem:[%s4 + $0x298] sm:$0xff] %vm1249, %v1673
  %1974 = vst.msk [vmem:[%s4 + $0x2a0] sm:$0xff] %vm1249, %v1675
  %1975 = vst.msk [vmem:[%s4 + $0x2a8] sm:$0xff] %vm1249, %v1677
  %1976 = vst.msk [vmem:[%s4 + $0x2b0] sm:$0xff] %vm1249, %v1679
  %1977 = vst.msk [vmem:[%s4 + $0x2b8] sm:$0xff] %vm1249, %v1681
  %1978 = vst.msk [vmem:[%s4 + $0x2c0] sm:$0xff] %vm1249, %v1683
  %1979 = vst.msk [vmem:[%s4 + $0x2c8] sm:$0xff] %vm1249, %v1685
  %1980 = vst.msk [vmem:[%s4 + $0x2d0] sm:$0xff] %vm1249, %v1687
  %1981 = vst.msk [vmem:[%s4 + $0x2d8] sm:$0xff] %vm1249, %v1689
  %1982 = vst.msk [vmem:[%s4 + $0x2e0] sm:$0xff] %vm1249, %v1691
  %1983 = vst.msk [vmem:[%s4 + $0x2e8] sm:$0xff] %vm1249, %v1693
  %1984 = vst.msk [vmem:[%s4 + $0x2f0] sm:$0xff] %vm1249, %v1695
  %1985 = vst.msk [vmem:[%s4 + $0x2f8] sm:$0xff] %vm1249, %v1697
  %1986 = vst.msk [vmem:[%s4 + $0x300] sm:$0xff] %vm1249, %v1699
  %1987 = vst.msk [vmem:[%s4 + $0x308] sm:$0xff] %vm1249, %v1701
  %1988 = vst.msk [vmem:[%s4 + $0x310] sm:$0xff] %vm1249, %v1703
  %1989 = vst.msk [vmem:[%s4 + $0x318] sm:$0xff] %vm1249, %v1705
  %1990 = vst.msk [vmem:[%s4 + $0x320] sm:$0xff] %vm1249, %v1707
  %1991 = vst.msk [vmem:[%s4 + $0x328] sm:$0xff] %vm1249, %v1709
  %1992 = vst.msk [vmem:[%s4 + $0x330] sm:$0xff] %vm1249, %v1711
  %1993 = vst.msk [vmem:[%s4 + $0x338] sm:$0xff] %vm1249, %v1713
  %1994 = vst.msk [vmem:[%s4 + $0x340] sm:$0xff] %vm1249, %v1715
  %1995 = vst.msk [vmem:[%s4 + $0x348] sm:$0xff] %vm1249, %v1717
  %1996 = vst.msk [vmem:[%s4 + $0x350] sm:$0xff] %vm1249, %v1719
  %1997 = vst.msk [vmem:[%s4 + $0x358] sm:$0xff] %vm1249, %v1721
  %1998 = vst.msk [vmem:[%s4 + $0x360] sm:$0xff] %vm1249, %v1723
  %1999 = vst.msk [vmem:[%s4 + $0x368] sm:$0xff] %vm1249, %v1725
  %2000 = vst.msk [vmem:[%s4 + $0x370] sm:$0xff] %vm1249, %v1727
  %2001 = vst.msk [vmem:[%s4 + $0x378] sm:$0xff] %vm1249, %v1729
  %2002 = vst.msk [vmem:[%s4 + $0x380] sm:$0xff] %vm1249, %v1731
  %2003 = vst.msk [vmem:[%s4 + $0x388] sm:$0xff] %vm1249, %v1733
  %2004 = vst.msk [vmem:[%s4 + $0x390] sm:$0xff] %vm1249, %v1735
  %2005 = vst.msk [vmem:[%s4 + $0x398] sm:$0xff] %vm1249, %v1737
  %2006 = vst.msk [vmem:[%s4 + $0x3a0] sm:$0xff] %vm1249, %v1739
  %2007 = vst.msk [vmem:[%s4 + $0x3a8] sm:$0xff] %vm1249, %v1741
  %2008 = vst.msk [vmem:[%s4 + $0x3b0] sm:$0xff] %vm1249, %v1743
  %2009 = vst.msk [vmem:[%s4 + $0x3b8] sm:$0xff] %vm1249, %v1745
  %2010 = vst.msk [vmem:[%s4 + $0x3c0] sm:$0xff] %vm1249, %v1747
  %2011 = vst.msk [vmem:[%s4 + $0x3c8] sm:$0xff] %vm1249, %v1749
  %2012 = vst.msk [vmem:[%s4 + $0x3d0] sm:$0xff] %vm1249, %v1751
  %2013 = vst.msk [vmem:[%s4 + $0x3d8] sm:$0xff] %vm1249, %v1753
  %2014 = vst.msk [vmem:[%s4 + $0x3e0] sm:$0xff] %vm1249, %v1755
  %2015 = vst.msk [vmem:[%s4 + $0x3e8] sm:$0xff] %vm1249, %v1757
  %2016 = vst.msk [vmem:[%s4 + $0x3f0] sm:$0xff] %vm1249, %v1759
  %2017 = vst.msk [vmem:[%s4 + $0x3f8] sm:$0xff] %vm1249, %v1761
  // Predicated region
  $region14: #{tpu_custom_call.1} parent=0 // pred_check
    _
  $region15: #{tpu_custom_call.1} parent=0 // pred_check_branch
    %2019 = sbr.rel (0) target = $region17
  $region16: #{tpu_custom_call.1} parent=0 // pred_region
    _
  $region17: #{tpu_custom_call.1} parent=0 // pred_fallthru
    _
  // Predicated region
  $region18: #{tpu_custom_call.1} parent=0 // pred_check
    _
  $region19: #{tpu_custom_call.1} parent=0 // pred_check_branch
    %2021 = sbr.rel (0) target = $region21
  $region20: #{tpu_custom_call.1} parent=0 // pred_region
    _
  $region21: #{tpu_custom_call.1} parent=0 // pred_fallthru
    _
  // Predicated region
  $region22: #{tpu_custom_call.1} parent=0 // pred_check
    _
  $region23: #{tpu_custom_call.1} parent=0 // pred_check_branch
    %2023 = sbr.rel (0) target = $region25
  $region24: #{tpu_custom_call.1} parent=0 // pred_region
    _
  $region25: #{tpu_custom_call.1} parent=0 // pred_fallthru
    _
  // Predicated region
  $region26: #{tpu_custom_call.1} parent=0 // pred_check
    _
  $region27: #{tpu_custom_call.1} parent=0 // pred_check_branch
    %2025 = sbr.rel (0) target = $region29
  $region28: #{tpu_custom_call.1} parent=0 // pred_region
    _
  $region29: #{tpu_custom_call.1} parent=0 // pred_fallthru
    _

</llo_original>
